<compile_context>
chip_gen: v7x
topology: tpu7x:2x2x1
jax: 0.10.0
libtpu: 0.0.40
codegen_flags: <defaults>
</compile_context>

<pallas_src>
import numpy as np
import jax
import jax.numpy as jnp
from jax import lax
from jax.experimental import pallas as pl
from jax.experimental.pallas import tpu as pltpu

VMEM_SPEC = pl.BlockSpec(memory_space=pltpu.MemorySpace.VMEM)
HEAD_ORDER = ("rot", "conf", "vib", "trans")


# ----------------------------- in-kernel helpers -----------------------------

def _gelu(x):
    # torch.nn.GELU() default = exact erf formulation
    return 0.5 * x * (1.0 + lax.erf(x * (1.0 / np.sqrt(2.0))))


def _silu(x):
    return x * jax.nn.sigmoid(x)


def _layernorm(x, gamma, beta, eps=1e-5):
    mean = jnp.mean(x, axis=-1, keepdims=True)
    var = jnp.mean((x - mean) ** 2, axis=-1, keepdims=True)
    return (x - mean) * lax.rsqrt(var + eps) * gamma + beta


# ----------------------------- Pallas kernels --------------------------------

def _encoder_heads_kernel(
        # data
        node_ref, eattr_ref, xyz_ref, src_ref, dst_ref, dstrow_ref, eps_ref,
        # initial node embedding (Linear/LN/GELU x2)
        emb1_w, emb1_b, emb1_g, emb1_bt,
        emb2_w, emb2_b, emb2_g, emb2_bt,
        # EGNN edge MLP (first weight pre-split: h_src | h_dst | radial | edge_attr)
        e1_w_src, e1_w_dst, e1_w_rad, e1_w_ef, e1_b,
        e2_w, e2_b,
        # EGNN node MLP (first weight pre-split: h | h_neigh)
        n1_w_h, n1_w_nb, n1_b,
        n2_w, n2_b,
        # mu / logvar / fused entropy heads
        mu_w, mu_b, lv_w, lv_b,
        hd_w, hd_b,
        # outputs
        z_ref, mu_ref, logvar_ref, heads_ref):
    f32 = jnp.float32
    n = node_ref.shape[0]
    e = src_ref.shape[0]

    # --- initial node embedding: (Linear -> LayerNorm -> GELU -> Dropout[id]) x2
    h = jnp.dot(node_ref[...], emb1_w[...], preferred_element_type=f32) + emb1_b[...]
    h = _gelu(_layernorm(h, emb1_g[...], emb1_bt[...]))
    h = jnp.dot(h, emb2_w[...], preferred_element_type=f32) + emb2_b[...]
    h = _gelu(_layernorm(h, emb2_g[...], emb2_bt[...]))
    # Encoder dropout(0.3) = identity (eval); .squeeze() is a no-op for N > 1.

    # --- gather node states / coords onto edges via one-hot matmuls (VMEM-only)
    node_ids = lax.broadcasted_iota(jnp.int32, (e, n), 1)            # [E, N]
    oh_src = jnp.where(node_ids == src_ref[...], 1.0, 0.0)           # src_ref [E, 1]
    oh_dst = jnp.where(node_ids == dst_ref[...], 1.0, 0.0)
    h_src = jnp.dot(oh_src, h, preferred_element_type=f32)           # [E, C]
    h_dst = jnp.dot(oh_dst, h, preferred_element_type=f32)
    x_src = jnp.dot(oh_src, xyz_ref[...], preferred_element_type=f32)
    x_dst = jnp.dot(oh_dst, xyz_ref[...], preferred_element_type=f32)
    x_diff = x_src - x_dst                                           # u_sub_v
    radial = jnp.sum(x_diff * x_diff, axis=-1, keepdims=True)        # [E, 1]
    # (normalized x_diff / coord MLP are dead compute — coord output discarded)

    # --- EGNN edge MLP; cat([h_src, h_dst, radial, edge_attr]) @ W expressed as
    #     split-weight matmuls (no in-kernel concatenation)
    m = (jnp.dot(h_src, e1_w_src[...], preferred_element_type=f32)
         + jnp.dot(h_dst, e1_w_dst[...], preferred_element_type=f32)
         + radial * e1_w_rad[...]
         + jnp.dot(eattr_ref[...], e1_w_ef[...], preferred_element_type=f32)
         + e1_b[...])
    m = _silu(m)
    msg_h = _silu(jnp.dot(m, e2_w[...], preferred_element_type=f32) + e2_b[...])

    # --- scatter-sum of messages to destination nodes ([N,E] one-hot from iota)
    node_ids_t = lax.broadcasted_iota(jnp.int32, (n, e), 0)          # [N, E]
    oh_dst_t = jnp.where(node_ids_t == dstrow_ref[...], 1.0, 0.0)    # dstrow [1, E]
    h_neigh = jnp.dot(oh_dst_t, msg_h, preferred_element_type=f32)   # [N, C]

    # --- EGNN node MLP; cat([h, h_neigh]) @ W as split-weight matmuls
    nh = _silu(jnp.dot(h, n1_w_h[...], preferred_element_type=f32)
               + jnp.dot(h_neigh, n1_w_nb[...], preferred_element_type=f32)
               + n1_b[...])
    h_out = jnp.dot(nh, n2_w[...], preferred_element_type=f32) + n2_b[...]

    # --- mu / logvar / reparametrize (torch: std = exp(logvar), eps = rand_like)
    mu = jnp.dot(h_out, mu_w[...], preferred_element_type=f32) + mu_b[...]
    logvar = jnp.dot(h_out, lv_w[...], preferred_element_type=f32) + lv_b[...]
    z = eps_ref[...] * jnp.exp(logvar) + mu
    mu_ref[...] = mu
    logvar_ref[...] = logvar
    z_ref[...] = z

    # --- entropy heads: only last Linear of each list matters; 4 heads fused
    #     into one lane-dense [N, 4*out_dim] slab; ReLU applied here.
    heads_ref[...] = jnp.maximum(
        jnp.dot(z, hd_w[...], preferred_element_type=f32) + hd_b[...], 0.0)


def _edge_decoder_kernel(h0_ref, h1_ref, w1_ref, b1_ref, w2_ref, b2_ref, o_ref):
    # x = z[e0] * z[e1];  x = relu(Linear1(x));  out = Linear2(x)   (sigmoid=False)
    f32 = jnp.float32
    x = h0_ref[...] * h1_ref[...]
    hidden = jnp.maximum(
        jnp.dot(x, w1_ref[...], preferred_element_type=f32) + b1_ref[...], 0.0)
    o_ref[...] = (jnp.dot(hidden, w2_ref[...], preferred_element_type=f32)
                  + b2_ref[...]).astype(o_ref.dtype)


# ----------------------------- pallas_call wrappers ---------------------------

def encoder_heads_forward(params, node_attr, edge_attr, xyz, src, dst, eps):
    n = node_attr.shape[0]
    e = edge_attr.shape[0]
    latent = eps.shape[1]
    heads_out = params["heads_w"].shape[1]
    src_col = jnp.asarray(src, jnp.int32).reshape(e, 1)
    dst_col = jnp.asarray(dst, jnp.int32).reshape(e, 1)
    dst_row = jnp.asarray(dst, jnp.int32).reshape(1, e)
    args = (node_attr.astype(jnp.float32), edge_attr.astype(jnp.float32),
            xyz.astype(jnp.float32), src_col, dst_col, dst_row,
            eps.astype(jnp.float32),
            *params["emb1"], *params["emb2"],
            *params["egnn_e1"], *params["egnn_e2"],
            *params["egnn_n1"], *params["egnn_n2"],
            *params["mu"], *params["logvar"],
            params["heads_w"], params["heads_b"])
    out_shape = (jax.ShapeDtypeStruct((n, latent), jnp.float32),   # z
                 jax.ShapeDtypeStruct((n, latent), jnp.float32),   # mu
                 jax.ShapeDtypeStruct((n, latent), jnp.float32),   # logvar
                 jax.ShapeDtypeStruct((n, heads_out), jnp.float32))
    # N=12 / E=24: a single whole-array VMEM block per operand is the right
    # tiling.  A parallel grid over nodes/edges (v7x 2-TC sharding) and bf16
    # matmul operands only pay off at much larger graphs.
    return pl.pallas_call(
        _encoder_heads_kernel,
        out_shape=out_shape,
        in_specs=[VMEM_SPEC] * len(args),
        out_specs=(VMEM_SPEC,) * len(out_shape),
    )(*args)


def edge_decoder_batched(params, z, edges):
    """EdgeDecoder on a fixed-size int32 [2, M] edge batch (pos + neg together)."""
    h0 = z[edges[0]]            # data-dependent gathers: plain-JAX glue
    h1 = z[edges[1]]
    w1, b1 = params["dec1"]
    w2, b2 = params["dec2"]
    m = h0.shape[0]
    return pl.pallas_call(
        _edge_decoder_kernel,
        out_shape=jax.ShapeDtypeStruct((m, w2.shape[1]), jnp.float32),
        in_specs=[VMEM_SPEC] * 6,
        out_specs=VMEM_SPEC,
    )(h0, h1, w1, b1, w2, b2)


# ----------------------------- parameter init --------------------------------

def init_linear(key, in_f, out_f, bias=True):
    # torch nn.Linear init distribution, but stored pre-transposed as [in, out]
    # so the kernels never transpose weights on the MXU path.
    kw, kb = jax.random.split(key)
    bound = 1.0 / np.sqrt(in_f)
    w = jax.random.uniform(kw, (in_f, out_f), jnp.float32, -bound, bound)
    if bias:
        b = jax.random.uniform(kb, (1, out_f), jnp.float32, -bound, bound)
    else:
        b = jnp.zeros((1, out_f), jnp.float32)
    return w, b


def init_params(key, n_input_feats, channels, latent, edge_feat_dim, out_dim):
    keys = jax.random.split(key, 24)
    k = iter(keys)
    ones = lambda c: jnp.ones((1, c), jnp.float32)
    zeros = lambda c: jnp.zeros((1, c), jnp.float32)
    p = {}
    # Encoder.initial_node_embedding: (Linear -> LayerNorm -> GELU -> Dropout) x2
    p["emb1"] = init_linear(next(k), n_input_feats, channels) + (ones(channels), zeros(channels))
    p["emb2"] = init_linear(next(k), channels, channels) + (ones(channels), zeros(channels))
    # EGNN edge MLP: Linear(2C+1+Fe -> C)+SiLU+Linear(C -> C)+SiLU; first weight
    # pre-split into (h_src | h_dst | radial | edge_attr) blocks.
    w, b = init_linear(next(k), 2 * channels + 1 + edge_feat_dim, channels)
    p["egnn_e1"] = (w[:channels], w[channels:2 * channels],
                    w[2 * channels:2 * channels + 1], w[2 * channels + 1:], b)
    p["egnn_e2"] = init_linear(next(k), channels, channels)
    # EGNN node MLP: Linear(2C -> C)+SiLU+Linear(C -> C); first weight pre-split
    # into (h | h_neigh) blocks.
    w, b = init_linear(next(k), 2 * channels, channels)
    p["egnn_n1"] = (w[:channels], w[channels:], b)
    p["egnn_n2"] = init_linear(next(k), channels, channels)
    # NOTE: EGNN coord MLP is dead compute (coord output discarded by GraphConv,
    # node update never reads it) -> not instantiated / not executed.
    p["mu"] = init_linear(next(k), channels, latent)
    p["logvar"] = init_linear(next(k), channels, latent)
    # EdgeDecoder(latent -> channels -> n_input_feats)
    p["dec1"] = init_linear(next(k), latent, channels)
    p["dec2"] = init_linear(next(k), channels, n_input_feats)
    # Entropy heads. entropy_module is never used in forward (commented out in
    # the reference). For conf/trans/rot/vib only the LAST Linear of each
    # 2-element ModuleList reaches the output (the Python loop overwrites), so
    # the four surviving Linears are stacked into one lane-dense [L, 4*out] slab.
    p["entropy_module"] = [init_linear(next(k), latent, out_dim)]
    for name in ("conf", "trans", "rot", "vib"):
        p[name] = [init_linear(next(k), latent, out_dim) for _ in range(2)]
    p["heads_w"] = jnp.concatenate([p[nm][-1][0] for nm in HEAD_ORDER], axis=1)
    p["heads_b"] = jnp.concatenate([p[nm][-1][1] for nm in HEAD_ORDER], axis=1)
    return p


# ----------------------------- model forward ---------------------------------

def maskgae_forward(params, node_attr, edge_attr, xyz, edge_index, key):
    k_mask, k_neg, k_eps = jax.random.split(key, 3)
    num_nodes = node_attr.shape[0]
    num_edges = edge_index.shape[1]
    latent = params["mu"][0].shape[1]

    # mask_edge(p=0.7): the masked/neg edge COUNT is data-dependent, so one host
    # sync is unavoidable to produce the spec's variable-shaped pos_out/neg_out.
    # The decoder kernel itself always sees a fixed [2*E]-row padded batch, so
    # its pallas_call signature never changes across mask draws.
    mask = np.asarray(jax.random.bernoulli(k_mask, 0.7, (num_edges,)))
    edge_index_np = np.asarray(edge_index, dtype=np.int32)
    masked_edges = edge_index_np[:, mask]
    num_masked = masked_edges.shape[1]
    # remaining_edges only feed dgl G.edge_ids / edge_subgraph bookkeeping whose
    # result is never used downstream.
    # TODO(synk): dgl edge_subgraph bookkeeping has no output effect; omitted.

    # random_negative_sampler: randint(0, num_nodes, (2, num_masked)), drawn at a
    # static (2, E) shape and truncated so the RNG op shape is mask-independent.
    neg_edges = np.asarray(
        jax.random.randint(k_neg, (2, num_edges), 0, num_nodes))[:, :num_masked]

    batch_edges = np.zeros((2, 2 * num_edges), dtype=np.int32)
    batch_edges[:, :num_masked] = masked_edges
    batch_edges[:, num_edges:num_edges + num_masked] = neg_edges

    # Encoder message passing runs on the FULL graph (as in the reference).
    src, dst = edge_index_np[0], edge_index_np[1]
    eps = jax.random.uniform(k_eps, (num_nodes, latent), jnp.float32)  # rand_like
    z, mu, logvar, heads = encoder_heads_forward(
        params, node_attr, edge_attr, xyz, src, dst, eps)

    dec_out = edge_decoder_batched(params, z, jnp.asarray(batch_edges))
    pos_out = dec_out[:num_masked]
    neg_out = dec_out[num_edges:num_edges + num_masked]
    return z, mu, logvar, heads, pos_out, neg_out


def entropy_model_forward(params, node_attr, edge_attr, xyz, edge_index, key):
    z, mu, logvar, heads, pos_out, neg_out = maskgae_forward(
        params, node_attr, edge_attr, xyz, edge_index, key)
    out_dim = params["heads_w"].shape[1] // len(HEAD_ORDER)
    # ReLU already applied in-kernel; split the lane-dense [N, 4*out_dim] slab.
    entropy_pred = {name: heads[:, i * out_dim:(i + 1) * out_dim]
                    for i, name in enumerate(HEAD_ORDER)}
    return entropy_pred, mu, logvar, pos_out, neg_out


# ----------------------------- main -------------------------------------------

if __name__ == "__main__":
    key = jax.random.PRNGKey(0)

    # small synthetic graph / config
    N, E = 12, 24
    n_input_feats, channels, latent = 16, 32, 8
    edge_feat_dim, out_dim = 7, 1

    k_param, k_node, k_edge, k_xyz, k_src, k_dst, k_fwd = jax.random.split(key, 7)
    params = init_params(k_param, n_input_feats, channels, latent,
                         edge_feat_dim, out_dim)

    node_attr = jax.random.normal(k_node, (N, n_input_feats), jnp.float32)
    edge_attr = jax.random.normal(k_edge, (E, edge_feat_dim), jnp.float32)
    xyz = jax.random.normal(k_xyz, (N, 3), jnp.float32)
    src = jax.random.randint(k_src, (E,), 0, N)
    dst = jax.random.randint(k_dst, (E,), 0, N)
    edge_index = jnp.stack([src, dst], axis=0)  # [2, E]

    entropy_pred, mu, logvar, pos_out, neg_out = entropy_model_forward(
        params, node_attr, edge_attr, xyz, edge_index, k_fwd)

    for v in list(entropy_pred.values()) + [mu, logvar, pos_out, neg_out]:
        jax.block_until_ready(v)

    assert entropy_pred["rot"].shape == (N, out_dim)
    assert entropy_pred["conf"].shape == (N, out_dim)
    assert mu.shape == (N, latent) and logvar.shape == (N, latent)
    assert pos_out.shape[1] == n_input_feats and neg_out.shape[1] == n_input_feats
    print("KERNEL_OK")
</pallas_src>

<mosaic_0001>
module attributes {stable_mosaic.version = 11 : i64} {
  func.func @_encoder_heads_kernel(%arg0: memref<12x16xf32, #tpu.memory_space<vmem>>, %arg1: memref<24x7xf32, #tpu.memory_space<vmem>>, %arg2: memref<12x3xf32, #tpu.memory_space<vmem>>, %arg3: memref<24x1xi32, #tpu.memory_space<vmem>>, %arg4: memref<24x1xi32, #tpu.memory_space<vmem>>, %arg5: memref<1x24xi32, #tpu.memory_space<vmem>>, %arg6: memref<12x8xf32, #tpu.memory_space<vmem>>, %arg7: memref<16x32xf32, #tpu.memory_space<vmem>>, %arg8: memref<1x32xf32, #tpu.memory_space<vmem>>, %arg9: memref<1x32xf32, #tpu.memory_space<vmem>>, %arg10: memref<1x32xf32, #tpu.memory_space<vmem>>, %arg11: memref<32x32xf32, #tpu.memory_space<vmem>>, %arg12: memref<1x32xf32, #tpu.memory_space<vmem>>, %arg13: memref<1x32xf32, #tpu.memory_space<vmem>>, %arg14: memref<1x32xf32, #tpu.memory_space<vmem>>, %arg15: memref<32x32xf32, #tpu.memory_space<vmem>>, %arg16: memref<32x32xf32, #tpu.memory_space<vmem>>, %arg17: memref<1x32xf32, #tpu.memory_space<vmem>>, %arg18: memref<7x32xf32, #tpu.memory_space<vmem>>, %arg19: memref<1x32xf32, #tpu.memory_space<vmem>>, %arg20: memref<32x32xf32, #tpu.memory_space<vmem>>, %arg21: memref<1x32xf32, #tpu.memory_space<vmem>>, %arg22: memref<32x32xf32, #tpu.memory_space<vmem>>, %arg23: memref<32x32xf32, #tpu.memory_space<vmem>>, %arg24: memref<1x32xf32, #tpu.memory_space<vmem>>, %arg25: memref<32x32xf32, #tpu.memory_space<vmem>>, %arg26: memref<1x32xf32, #tpu.memory_space<vmem>>, %arg27: memref<32x8xf32, #tpu.memory_space<vmem>>, %arg28: memref<1x8xf32, #tpu.memory_space<vmem>>, %arg29: memref<32x8xf32, #tpu.memory_space<vmem>>, %arg30: memref<1x8xf32, #tpu.memory_space<vmem>>, %arg31: memref<8x4xf32, #tpu.memory_space<vmem>>, %arg32: memref<1x4xf32, #tpu.memory_space<vmem>>, %arg33: memref<12x8xf32, #tpu.memory_space<vmem>>, %arg34: memref<12x8xf32, #tpu.memory_space<vmem>>, %arg35: memref<12x8xf32, #tpu.memory_space<vmem>>, %arg36: memref<12x4xf32, #tpu.memory_space<vmem>>) attributes {dimension_semantics = [], scalar_prefetch = 0 : i64, scratch_operands = 0 : i64, tpu.core_type = #tpu.core_type<tc>} {
    %c0 = arith.constant 0 : index
    %c0_0 = arith.constant 0 : index
    %0 = vector.load %arg0[%c0, %c0_0] : memref<12x16xf32, #tpu.memory_space<vmem>>, vector<12x16xf32>
    %c0_1 = arith.constant 0 : index
    %c0_2 = arith.constant 0 : index
    %1 = vector.load %arg7[%c0_1, %c0_2] : memref<16x32xf32, #tpu.memory_space<vmem>>, vector<16x32xf32>
    %cst = arith.constant dense<0.000000e+00> : vector<12x32xf32>
    %2 = tpu.matmul %0, %1, %cst {dimension_numbers = #tpu.dot_dimension_numbers<[1], [0], [0], [1], [0, 0, 1, 1], [], []>} : vector<12x16xf32>, vector<16x32xf32>, vector<12x32xf32> -> vector<12x32xf32>
    %c0_3 = arith.constant 0 : index
    %c0_4 = arith.constant 0 : index
    %3 = vector.load %arg8[%c0_3, %c0_4] : memref<1x32xf32, #tpu.memory_space<vmem>>, vector<1x32xf32>
    %4 = vector.broadcast %3 : vector<1x32xf32> to vector<12x32xf32>
    %5 = arith.addf %2, %4 : vector<12x32xf32>
    %c0_5 = arith.constant 0 : index
    %c0_6 = arith.constant 0 : index
    %6 = vector.load %arg9[%c0_5, %c0_6] : memref<1x32xf32, #tpu.memory_space<vmem>>, vector<1x32xf32>
    %c0_7 = arith.constant 0 : index
    %c0_8 = arith.constant 0 : index
    %7 = vector.load %arg10[%c0_7, %c0_8] : memref<1x32xf32, #tpu.memory_space<vmem>>, vector<1x32xf32>
    %cst_9 = arith.constant dense<0.000000e+00> : vector<12xf32>
    %8 = vector.multi_reduction <add>, %5, %cst_9 [1] : vector<12x32xf32> to vector<12xf32>
    %9 = vector.shape_cast %8 : vector<12xf32> to vector<12x1xf32>
    %cst_10 = arith.constant 3.200000e+01 : f32
    %10 = vector.broadcast %cst_10 : f32 to vector<12x1xf32>
    %11 = arith.divf %9, %10 : vector<12x1xf32>
    %12 = vector.broadcast %11 : vector<12x1xf32> to vector<12x32xf32>
    %13 = arith.subf %5, %12 : vector<12x32xf32>
    %14 = arith.mulf %13, %13 : vector<12x32xf32>
    %cst_11 = arith.constant dense<0.000000e+00> : vector<12xf32>
    %15 = vector.multi_reduction <add>, %14, %cst_11 [1] : vector<12x32xf32> to vector<12xf32>
    %16 = vector.shape_cast %15 : vector<12xf32> to vector<12x1xf32>
    %cst_12 = arith.constant 3.200000e+01 : f32
    %17 = vector.broadcast %cst_12 : f32 to vector<12x1xf32>
    %18 = arith.divf %16, %17 : vector<12x1xf32>
    %19 = vector.broadcast %11 : vector<12x1xf32> to vector<12x32xf32>
    %20 = arith.subf %5, %19 : vector<12x32xf32>
    %cst_13 = arith.constant 9.99999974E-6 : f32
    %21 = vector.broadcast %cst_13 : f32 to vector<12x1xf32>
    %22 = arith.addf %18, %21 : vector<12x1xf32>
    %23 = math.rsqrt %22 : vector<12x1xf32>
    %24 = vector.broadcast %23 : vector<12x1xf32> to vector<12x32xf32>
    %25 = arith.mulf %20, %24 : vector<12x32xf32>
    %26 = vector.broadcast %6 : vector<1x32xf32> to vector<12x32xf32>
    %27 = arith.mulf %25, %26 : vector<12x32xf32>
    %28 = vector.broadcast %7 : vector<1x32xf32> to vector<12x32xf32>
    %29 = arith.addf %27, %28 : vector<12x32xf32>
    %cst_14 = arith.constant 5.000000e-01 : f32
    %30 = vector.broadcast %cst_14 : f32 to vector<12x32xf32>
    %31 = arith.mulf %30, %29 : vector<12x32xf32>
    %cst_15 = arith.constant 0.707106769 : f32
    %32 = vector.broadcast %cst_15 : f32 to vector<12x32xf32>
    %33 = arith.mulf %29, %32 : vector<12x32xf32>
    %34 = math.erf %33 : vector<12x32xf32>
    %cst_16 = arith.constant 1.000000e+00 : f32
    %35 = vector.broadcast %cst_16 : f32 to vector<12x32xf32>
    %36 = arith.addf %35, %34 : vector<12x32xf32>
    %37 = arith.mulf %31, %36 : vector<12x32xf32>
    %c0_17 = arith.constant 0 : index
    %c0_18 = arith.constant 0 : index
    %38 = vector.load %arg11[%c0_17, %c0_18] : memref<32x32xf32, #tpu.memory_space<vmem>>, vector<32x32xf32>
    %cst_19 = arith.constant dense<0.000000e+00> : vector<12x32xf32>
    %39 = tpu.matmul %37, %38, %cst_19 {dimension_numbers = #tpu.dot_dimension_numbers<[1], [0], [0], [1], [0, 0, 1, 1], [], []>} : vector<12x32xf32>, vector<32x32xf32>, vector<12x32xf32> -> vector<12x32xf32>
    %c0_20 = arith.constant 0 : index
    %c0_21 = arith.constant 0 : index
    %40 = vector.load %arg12[%c0_20, %c0_21] : memref<1x32xf32, #tpu.memory_space<vmem>>, vector<1x32xf32>
    %41 = vector.broadcast %40 : vector<1x32xf32> to vector<12x32xf32>
    %42 = arith.addf %39, %41 : vector<12x32xf32>
    %c0_22 = arith.constant 0 : index
    %c0_23 = arith.constant 0 : index
    %43 = vector.load %arg13[%c0_22, %c0_23] : memref<1x32xf32, #tpu.memory_space<vmem>>, vector<1x32xf32>
    %c0_24 = arith.constant 0 : index
    %c0_25 = arith.constant 0 : index
    %44 = vector.load %arg14[%c0_24, %c0_25] : memref<1x32xf32, #tpu.memory_space<vmem>>, vector<1x32xf32>
    %cst_26 = arith.constant dense<0.000000e+00> : vector<12xf32>
    %45 = vector.multi_reduction <add>, %42, %cst_26 [1] : vector<12x32xf32> to vector<12xf32>
    %46 = vector.shape_cast %45 : vector<12xf32> to vector<12x1xf32>
    %cst_27 = arith.constant 3.200000e+01 : f32
    %47 = vector.broadcast %cst_27 : f32 to vector<12x1xf32>
    %48 = arith.divf %46, %47 : vector<12x1xf32>
    %49 = vector.broadcast %48 : vector<12x1xf32> to vector<12x32xf32>
    %50 = arith.subf %42, %49 : vector<12x32xf32>
    %51 = arith.mulf %50, %50 : vector<12x32xf32>
    %cst_28 = arith.constant dense<0.000000e+00> : vector<12xf32>
    %52 = vector.multi_reduction <add>, %51, %cst_28 [1] : vector<12x32xf32> to vector<12xf32>
    %53 = vector.shape_cast %52 : vector<12xf32> to vector<12x1xf32>
    %cst_29 = arith.constant 3.200000e+01 : f32
    %54 = vector.broadcast %cst_29 : f32 to vector<12x1xf32>
    %55 = arith.divf %53, %54 : vector<12x1xf32>
    %56 = vector.broadcast %48 : vector<12x1xf32> to vector<12x32xf32>
    %57 = arith.subf %42, %56 : vector<12x32xf32>
    %cst_30 = arith.constant 9.99999974E-6 : f32
    %58 = vector.broadcast %cst_30 : f32 to vector<12x1xf32>
    %59 = arith.addf %55, %58 : vector<12x1xf32>
    %60 = math.rsqrt %59 : vector<12x1xf32>
    %61 = vector.broadcast %60 : vector<12x1xf32> to vector<12x32xf32>
    %62 = arith.mulf %57, %61 : vector<12x32xf32>
    %63 = vector.broadcast %43 : vector<1x32xf32> to vector<12x32xf32>
    %64 = arith.mulf %62, %63 : vector<12x32xf32>
    %65 = vector.broadcast %44 : vector<1x32xf32> to vector<12x32xf32>
    %66 = arith.addf %64, %65 : vector<12x32xf32>
    %cst_31 = arith.constant 5.000000e-01 : f32
    %67 = vector.broadcast %cst_31 : f32 to vector<12x32xf32>
    %68 = arith.mulf %67, %66 : vector<12x32xf32>
    %cst_32 = arith.constant 0.707106769 : f32
    %69 = vector.broadcast %cst_32 : f32 to vector<12x32xf32>
    %70 = arith.mulf %66, %69 : vector<12x32xf32>
    %71 = math.erf %70 : vector<12x32xf32>
    %cst_33 = arith.constant 1.000000e+00 : f32
    %72 = vector.broadcast %cst_33 : f32 to vector<12x32xf32>
    %73 = arith.addf %72, %71 : vector<12x32xf32>
    %74 = arith.mulf %68, %73 : vector<12x32xf32>
    %75 = tpu.iota {dimensions = array<i32: 1>} : vector<24x12xi32>
    %c0_34 = arith.constant 0 : index
    %c0_35 = arith.constant 0 : index
    %76 = vector.load %arg3[%c0_34, %c0_35] : memref<24x1xi32, #tpu.memory_space<vmem>>, vector<24x1xi32>
    %77 = vector.broadcast %76 : vector<24x1xi32> to vector<24x12xi32>
    %78 = arith.cmpi eq, %75, %77 : vector<24x12xi32>
    %cst_36 = arith.constant 1.000000e+00 : f32
    %cst_37 = arith.constant 0.000000e+00 : f32
    %79 = vector.broadcast %cst_36 : f32 to vector<24x12xf32>
    %80 = vector.broadcast %cst_37 : f32 to vector<24x12xf32>
    %81 = arith.select %78, %79, %80 : vector<24x12xi1>, vector<24x12xf32>
    %c0_38 = arith.constant 0 : index
    %c0_39 = arith.constant 0 : index
    %82 = vector.load %arg4[%c0_38, %c0_39] : memref<24x1xi32, #tpu.memory_space<vmem>>, vector<24x1xi32>
    %83 = vector.broadcast %82 : vector<24x1xi32> to vector<24x12xi32>
    %84 = arith.cmpi eq, %75, %83 : vector<24x12xi32>
    %cst_40 = arith.constant 1.000000e+00 : f32
    %cst_41 = arith.constant 0.000000e+00 : f32
    %85 = vector.broadcast %cst_40 : f32 to vector<24x12xf32>
    %86 = vector.broadcast %cst_41 : f32 to vector<24x12xf32>
    %87 = arith.select %84, %85, %86 : vector<24x12xi1>, vector<24x12xf32>
    %cst_42 = arith.constant dense<0.000000e+00> : vector<24x32xf32>
    %88 = tpu.matmul %81, %74, %cst_42 {dimension_numbers = #tpu.dot_dimension_numbers<[1], [0], [0], [1], [0, 0, 1, 1], [], []>} : vector<24x12xf32>, vector<12x32xf32>, vector<24x32xf32> -> vector<24x32xf32>
    %cst_43 = arith.constant dense<0.000000e+00> : vector<24x32xf32>
    %89 = tpu.matmul %87, %74, %cst_43 {dimension_numbers = #tpu.dot_dimension_numbers<[1], [0], [0], [1], [0, 0, 1, 1], [], []>} : vector<24x12xf32>, vector<12x32xf32>, vector<24x32xf32> -> vector<24x32xf32>
    %c0_44 = arith.constant 0 : index
    %c0_45 = arith.constant 0 : index
    %90 = vector.load %arg2[%c0_44, %c0_45] : memref<12x3xf32, #tpu.memory_space<vmem>>, vector<12x3xf32>
    %cst_46 = arith.constant dense<0.000000e+00> : vector<24x3xf32>
    %91 = tpu.matmul %81, %90, %cst_46 {dimension_numbers = #tpu.dot_dimension_numbers<[1], [0], [0], [1], [0, 0, 1, 1], [], []>} : vector<24x12xf32>, vector<12x3xf32>, vector<24x3xf32> -> vector<24x3xf32>
    %c0_47 = arith.constant 0 : index
    %c0_48 = arith.constant 0 : index
    %92 = vector.load %arg2[%c0_47, %c0_48] : memref<12x3xf32, #tpu.memory_space<vmem>>, vector<12x3xf32>
    %cst_49 = arith.constant dense<0.000000e+00> : vector<24x3xf32>
    %93 = tpu.matmul %87, %92, %cst_49 {dimension_numbers = #tpu.dot_dimension_numbers<[1], [0], [0], [1], [0, 0, 1, 1], [], []>} : vector<24x12xf32>, vector<12x3xf32>, vector<24x3xf32> -> vector<24x3xf32>
    %94 = arith.subf %91, %93 : vector<24x3xf32>
    %95 = arith.mulf %94, %94 : vector<24x3xf32>
    %cst_50 = arith.constant dense<0.000000e+00> : vector<24xf32>
    %96 = vector.multi_reduction <add>, %95, %cst_50 [1] : vector<24x3xf32> to vector<24xf32>
    %97 = vector.shape_cast %96 : vector<24xf32> to vector<24x1xf32>
    %c0_51 = arith.constant 0 : index
    %c0_52 = arith.constant 0 : index
    %98 = vector.load %arg15[%c0_51, %c0_52] : memref<32x32xf32, #tpu.memory_space<vmem>>, vector<32x32xf32>
    %cst_53 = arith.constant dense<0.000000e+00> : vector<24x32xf32>
    %99 = tpu.matmul %88, %98, %cst_53 {dimension_numbers = #tpu.dot_dimension_numbers<[1], [0], [0], [1], [0, 0, 1, 1], [], []>} : vector<24x32xf32>, vector<32x32xf32>, vector<24x32xf32> -> vector<24x32xf32>
    %c0_54 = arith.constant 0 : index
    %c0_55 = arith.constant 0 : index
    %100 = vector.load %arg16[%c0_54, %c0_55] : memref<32x32xf32, #tpu.memory_space<vmem>>, vector<32x32xf32>
    %cst_56 = arith.constant dense<0.000000e+00> : vector<24x32xf32>
    %101 = tpu.matmul %89, %100, %cst_56 {dimension_numbers = #tpu.dot_dimension_numbers<[1], [0], [0], [1], [0, 0, 1, 1], [], []>} : vector<24x32xf32>, vector<32x32xf32>, vector<24x32xf32> -> vector<24x32xf32>
    %102 = arith.addf %99, %101 : vector<24x32xf32>
    %c0_57 = arith.constant 0 : index
    %c0_58 = arith.constant 0 : index
    %103 = vector.load %arg17[%c0_57, %c0_58] : memref<1x32xf32, #tpu.memory_space<vmem>>, vector<1x32xf32>
    %104 = vector.broadcast %97 : vector<24x1xf32> to vector<24x32xf32>
    %105 = vector.broadcast %103 : vector<1x32xf32> to vector<24x32xf32>
    %106 = arith.mulf %104, %105 : vector<24x32xf32>
    %107 = arith.addf %102, %106 : vector<24x32xf32>
    %c0_59 = arith.constant 0 : index
    %c0_60 = arith.constant 0 : index
    %108 = vector.load %arg1[%c0_59, %c0_60] : memref<24x7xf32, #tpu.memory_space<vmem>>, vector<24x7xf32>
    %c0_61 = arith.constant 0 : index
    %c0_62 = arith.constant 0 : index
    %109 = vector.load %arg18[%c0_61, %c0_62] : memref<7x32xf32, #tpu.memory_space<vmem>>, vector<7x32xf32>
    %cst_63 = arith.constant dense<0.000000e+00> : vector<24x32xf32>
    %110 = tpu.matmul %108, %109, %cst_63 {dimension_numbers = #tpu.dot_dimension_numbers<[1], [0], [0], [1], [0, 0, 1, 1], [], []>} : vector<24x7xf32>, vector<7x32xf32>, vector<24x32xf32> -> vector<24x32xf32>
    %111 = arith.addf %107, %110 : vector<24x32xf32>
    %c0_64 = arith.constant 0 : index
    %c0_65 = arith.constant 0 : index
    %112 = vector.load %arg19[%c0_64, %c0_65] : memref<1x32xf32, #tpu.memory_space<vmem>>, vector<1x32xf32>
    %113 = vector.broadcast %112 : vector<1x32xf32> to vector<24x32xf32>
    %114 = arith.addf %111, %113 : vector<24x32xf32>
    %115 = arith.negf %114 : vector<24x32xf32>
    %116 = math.exp %115 : vector<24x32xf32>
    %cst_66 = arith.constant 1.000000e+00 : f32
    %117 = vector.broadcast %cst_66 : f32 to vector<24x32xf32>
    %118 = arith.addf %117, %116 : vector<24x32xf32>
    %119 = arith.divf %117, %118 : vector<24x32xf32>
    %120 = arith.mulf %114, %119 : vector<24x32xf32>
    %c0_67 = arith.constant 0 : index
    %c0_68 = arith.constant 0 : index
    %121 = vector.load %arg20[%c0_67, %c0_68] : memref<32x32xf32, #tpu.memory_space<vmem>>, vector<32x32xf32>
    %cst_69 = arith.constant dense<0.000000e+00> : vector<24x32xf32>
    %122 = tpu.matmul %120, %121, %cst_69 {dimension_numbers = #tpu.dot_dimension_numbers<[1], [0], [0], [1], [0, 0, 1, 1], [], []>} : vector<24x32xf32>, vector<32x32xf32>, vector<24x32xf32> -> vector<24x32xf32>
    %c0_70 = arith.constant 0 : index
    %c0_71 = arith.constant 0 : index
    %123 = vector.load %arg21[%c0_70, %c0_71] : memref<1x32xf32, #tpu.memory_space<vmem>>, vector<1x32xf32>
    %124 = vector.broadcast %123 : vector<1x32xf32> to vector<24x32xf32>
    %125 = arith.addf %122, %124 : vector<24x32xf32>
    %126 = arith.negf %125 : vector<24x32xf32>
    %127 = math.exp %126 : vector<24x32xf32>
    %cst_72 = arith.constant 1.000000e+00 : f32
    %128 = vector.broadcast %cst_72 : f32 to vector<24x32xf32>
    %129 = arith.addf %128, %127 : vector<24x32xf32>
    %130 = arith.divf %128, %129 : vector<24x32xf32>
    %131 = arith.mulf %125, %130 : vector<24x32xf32>
    %132 = tpu.iota {dimensions = array<i32: 0>} : vector<12x24xi32>
    %c0_73 = arith.constant 0 : index
    %c0_74 = arith.constant 0 : index
    %133 = vector.load %arg5[%c0_73, %c0_74] : memref<1x24xi32, #tpu.memory_space<vmem>>, vector<1x24xi32>
    %134 = vector.broadcast %133 : vector<1x24xi32> to vector<12x24xi32>
    %135 = arith.cmpi eq, %132, %134 : vector<12x24xi32>
    %cst_75 = arith.constant 1.000000e+00 : f32
    %cst_76 = arith.constant 0.000000e+00 : f32
    %136 = vector.broadcast %cst_75 : f32 to vector<12x24xf32>
    %137 = vector.broadcast %cst_76 : f32 to vector<12x24xf32>
    %138 = arith.select %135, %136, %137 : vector<12x24xi1>, vector<12x24xf32>
    %cst_77 = arith.constant dense<0.000000e+00> : vector<12x32xf32>
    %139 = tpu.matmul %138, %131, %cst_77 {dimension_numbers = #tpu.dot_dimension_numbers<[1], [0], [0], [1], [0, 0, 1, 1], [], []>} : vector<12x24xf32>, vector<24x32xf32>, vector<12x32xf32> -> vector<12x32xf32>
    %c0_78 = arith.constant 0 : index
    %c0_79 = arith.constant 0 : index
    %140 = vector.load %arg22[%c0_78, %c0_79] : memref<32x32xf32, #tpu.memory_space<vmem>>, vector<32x32xf32>
    %cst_80 = arith.constant dense<0.000000e+00> : vector<12x32xf32>
    %141 = tpu.matmul %74, %140, %cst_80 {dimension_numbers = #tpu.dot_dimension_numbers<[1], [0], [0], [1], [0, 0, 1, 1], [], []>} : vector<12x32xf32>, vector<32x32xf32>, vector<12x32xf32> -> vector<12x32xf32>
    %c0_81 = arith.constant 0 : index
    %c0_82 = arith.constant 0 : index
    %142 = vector.load %arg23[%c0_81, %c0_82] : memref<32x32xf32, #tpu.memory_space<vmem>>, vector<32x32xf32>
    %cst_83 = arith.constant dense<0.000000e+00> : vector<12x32xf32>
    %143 = tpu.matmul %139, %142, %cst_83 {dimension_numbers = #tpu.dot_dimension_numbers<[1], [0], [0], [1], [0, 0, 1, 1], [], []>} : vector<12x32xf32>, vector<32x32xf32>, vector<12x32xf32> -> vector<12x32xf32>
    %144 = arith.addf %141, %143 : vector<12x32xf32>
    %c0_84 = arith.constant 0 : index
    %c0_85 = arith.constant 0 : index
    %145 = vector.load %arg24[%c0_84, %c0_85] : memref<1x32xf32, #tpu.memory_space<vmem>>, vector<1x32xf32>
    %146 = vector.broadcast %145 : vector<1x32xf32> to vector<12x32xf32>
    %147 = arith.addf %144, %146 : vector<12x32xf32>
    %148 = arith.negf %147 : vector<12x32xf32>
    %149 = math.exp %148 : vector<12x32xf32>
    %cst_86 = arith.constant 1.000000e+00 : f32
    %150 = vector.broadcast %cst_86 : f32 to vector<12x32xf32>
    %151 = arith.addf %150, %149 : vector<12x32xf32>
    %152 = arith.divf %150, %151 : vector<12x32xf32>
    %153 = arith.mulf %147, %152 : vector<12x32xf32>
    %c0_87 = arith.constant 0 : index
    %c0_88 = arith.constant 0 : index
    %154 = vector.load %arg25[%c0_87, %c0_88] : memref<32x32xf32, #tpu.memory_space<vmem>>, vector<32x32xf32>
    %cst_89 = arith.constant dense<0.000000e+00> : vector<12x32xf32>
    %155 = tpu.matmul %153, %154, %cst_89 {dimension_numbers = #tpu.dot_dimension_numbers<[1], [0], [0], [1], [0, 0, 1, 1], [], []>} : vector<12x32xf32>, vector<32x32xf32>, vector<12x32xf32> -> vector<12x32xf32>
    %c0_90 = arith.constant 0 : index
    %c0_91 = arith.constant 0 : index
    %156 = vector.load %arg26[%c0_90, %c0_91] : memref<1x32xf32, #tpu.memory_space<vmem>>, vector<1x32xf32>
    %157 = vector.broadcast %156 : vector<1x32xf32> to vector<12x32xf32>
    %158 = arith.addf %155, %157 : vector<12x32xf32>
    %c0_92 = arith.constant 0 : index
    %c0_93 = arith.constant 0 : index
    %159 = vector.load %arg27[%c0_92, %c0_93] : memref<32x8xf32, #tpu.memory_space<vmem>>, vector<32x8xf32>
    %cst_94 = arith.constant dense<0.000000e+00> : vector<12x8xf32>
    %160 = tpu.matmul %158, %159, %cst_94 {dimension_numbers = #tpu.dot_dimension_numbers<[1], [0], [0], [1], [0, 0, 1, 1], [], []>} : vector<12x32xf32>, vector<32x8xf32>, vector<12x8xf32> -> vector<12x8xf32>
    %c0_95 = arith.constant 0 : index
    %c0_96 = arith.constant 0 : index
    %161 = vector.load %arg28[%c0_95, %c0_96] : memref<1x8xf32, #tpu.memory_space<vmem>>, vector<1x8xf32>
    %162 = vector.broadcast %161 : vector<1x8xf32> to vector<12x8xf32>
    %163 = arith.addf %160, %162 : vector<12x8xf32>
    %c0_97 = arith.constant 0 : index
    %c0_98 = arith.constant 0 : index
    %164 = vector.load %arg29[%c0_97, %c0_98] : memref<32x8xf32, #tpu.memory_space<vmem>>, vector<32x8xf32>
    %cst_99 = arith.constant dense<0.000000e+00> : vector<12x8xf32>
    %165 = tpu.matmul %158, %164, %cst_99 {dimension_numbers = #tpu.dot_dimension_numbers<[1], [0], [0], [1], [0, 0, 1, 1], [], []>} : vector<12x32xf32>, vector<32x8xf32>, vector<12x8xf32> -> vector<12x8xf32>
    %c0_100 = arith.constant 0 : index
    %c0_101 = arith.constant 0 : index
    %166 = vector.load %arg30[%c0_100, %c0_101] : memref<1x8xf32, #tpu.memory_space<vmem>>, vector<1x8xf32>
    %167 = vector.broadcast %166 : vector<1x8xf32> to vector<12x8xf32>
    %168 = arith.addf %165, %167 : vector<12x8xf32>
    %c0_102 = arith.constant 0 : index
    %c0_103 = arith.constant 0 : index
    %169 = vector.load %arg6[%c0_102, %c0_103] : memref<12x8xf32, #tpu.memory_space<vmem>>, vector<12x8xf32>
    %170 = math.exp %168 : vector<12x8xf32>
    %171 = arith.mulf %169, %170 : vector<12x8xf32>
    %172 = arith.addf %171, %163 : vector<12x8xf32>
    %c0_104 = arith.constant 0 : index
    %c0_105 = arith.constant 0 : index
    %173 = vector.load %arg34[%c0_104, %c0_105] : memref<12x8xf32, #tpu.memory_space<vmem>>, vector<12x8xf32>
    tpu.vector_store %arg34[%c0_104, %c0_105], %163 {strides = array<i32>} : memref<12x8xf32, #tpu.memory_space<vmem>>, vector<12x8xf32>,
    %c0_106 = arith.constant 0 : index
    %c0_107 = arith.constant 0 : index
    %174 = vector.load %arg35[%c0_106, %c0_107] : memref<12x8xf32, #tpu.memory_space<vmem>>, vector<12x8xf32>
    tpu.vector_store %arg35[%c0_106, %c0_107], %168 {strides = array<i32>} : memref<12x8xf32, #tpu.memory_space<vmem>>, vector<12x8xf32>,
    %c0_108 = arith.constant 0 : index
    %c0_109 = arith.constant 0 : index
    %175 = vector.load %arg33[%c0_108, %c0_109] : memref<12x8xf32, #tpu.memory_space<vmem>>, vector<12x8xf32>
    tpu.vector_store %arg33[%c0_108, %c0_109], %172 {strides = array<i32>} : memref<12x8xf32, #tpu.memory_space<vmem>>, vector<12x8xf32>,
    %c0_110 = arith.constant 0 : index
    %c0_111 = arith.constant 0 : index
    %176 = vector.load %arg31[%c0_110, %c0_111] : memref<8x4xf32, #tpu.memory_space<vmem>>, vector<8x4xf32>
    %cst_112 = arith.constant dense<0.000000e+00> : vector<12x4xf32>
    %177 = tpu.matmul %172, %176, %cst_112 {dimension_numbers = #tpu.dot_dimension_numbers<[1], [0], [0], [1], [0, 0, 1, 1], [], []>} : vector<12x8xf32>, vector<8x4xf32>, vector<12x4xf32> -> vector<12x4xf32>
    %c0_113 = arith.constant 0 : index
    %c0_114 = arith.constant 0 : index
    %178 = vector.load %arg32[%c0_113, %c0_114] : memref<1x4xf32, #tpu.memory_space<vmem>>, vector<1x4xf32>
    %179 = vector.broadcast %178 : vector<1x4xf32> to vector<12x4xf32>
    %180 = arith.addf %177, %179 : vector<12x4xf32>
    %cst_115 = arith.constant 0.000000e+00 : f32
    %181 = vector.broadcast %cst_115 : f32 to vector<12x4xf32>
    %182 = arith.maximumf %180, %181 : vector<12x4xf32>
    %c0_116 = arith.constant 0 : index
    %c0_117 = arith.constant 0 : index
    %183 = vector.load %arg36[%c0_116, %c0_117] : memref<12x4xf32, #tpu.memory_space<vmem>>, vector<12x4xf32>
    tpu.vector_store %arg36[%c0_116, %c0_117], %182 {strides = array<i32>} : memref<12x4xf32, #tpu.memory_space<vmem>>, vector<12x4xf32>,
    return
  }
}

</mosaic_0001>

<llo_original>
// kernel: tpu_custom_call.1
$region0: #{tpu_custom_call.1}
  #allocation0 [shape = 'u32[]', space=smem, size = 0x4, offset = 0x4, fixed_abs, tag = 'smem constant byte address 0x4 - core index']
  #allocation1 [shape = 'u32[144,128]{1,0:T(1,128)}', space=vmem, size = 0x12000, scoped, tag = 'internal scratch']
  %s0 = inlined_call_operand.smem [shape: u32[37], index: -1, kind: input, shape index: {}]
  %s1 = sld [smem:[%s0]]
  %s2 = scalar_lea.smem %s0, 1
  %s3 = sld [smem:[%s2]]
  %s4 = scalar_lea.smem %s0, 2
  %s5 = sld [smem:[%s4]]
  %s6 = scalar_lea.smem %s0, 3
  %s7 = sld [smem:[%s6]]
  %s8 = scalar_lea.smem %s0, 4
  %s9 = sld [smem:[%s8]]
  %s10 = scalar_lea.smem %s0, 5
  %s11 = sld [smem:[%s10]]
  %s12 = scalar_lea.smem %s0, 6
  %s13 = sld [smem:[%s12]]
  %s14 = scalar_lea.smem %s0, 7
  %s15 = sld [smem:[%s14]]
  %s16 = scalar_lea.smem %s0, 8
  %s17 = sld [smem:[%s16]]
  %s18 = scalar_lea.smem %s0, 9
  %s19 = sld [smem:[%s18]]
  %s20 = scalar_lea.smem %s0, 10
  %s21 = sld [smem:[%s20]]
  %s22 = scalar_lea.smem %s0, 11
  %s23 = sld [smem:[%s22]]
  %s24 = scalar_lea.smem %s0, 12
  %s25 = sld [smem:[%s24]]
  %s26 = scalar_lea.smem %s0, 13
  %s27 = sld [smem:[%s26]]
  %s28 = scalar_lea.smem %s0, 14
  %s29 = sld [smem:[%s28]]
  %s30 = scalar_lea.smem %s0, 15
  %s31 = sld [smem:[%s30]]
  %s32 = scalar_lea.smem %s0, 16
  %s33 = sld [smem:[%s32]]
  %s34 = scalar_lea.smem %s0, 17
  %s35 = sld [smem:[%s34]]
  %s36 = scalar_lea.smem %s0, 18
  %s37 = sld [smem:[%s36]]
  %s38 = scalar_lea.smem %s0, 19
  %s39 = sld [smem:[%s38]]
  %s40 = scalar_lea.smem %s0, 20
  %s41 = sld [smem:[%s40]]
  %s42 = scalar_lea.smem %s0, 21
  %s43 = sld [smem:[%s42]]
  %s44 = scalar_lea.smem %s0, 22
  %s45 = sld [smem:[%s44]]
  %s46 = scalar_lea.smem %s0, 23
  %s47 = sld [smem:[%s46]]
  %s48 = scalar_lea.smem %s0, 24
  %s49 = sld [smem:[%s48]]
  %s50 = scalar_lea.smem %s0, 25
  %s51 = sld [smem:[%s50]]
  %s52 = scalar_lea.smem %s0, 26
  %s53 = sld [smem:[%s52]]
  %s54 = scalar_lea.smem %s0, 27
  %s55 = sld [smem:[%s54]]
  %s56 = scalar_lea.smem %s0, 28
  %s57 = sld [smem:[%s56]]
  %s58 = scalar_lea.smem %s0, 29
  %s59 = sld [smem:[%s58]]
  %s60 = scalar_lea.smem %s0, 30
  %s61 = sld [smem:[%s60]]
  %s62 = scalar_lea.smem %s0, 31
  %s63 = sld [smem:[%s62]]
  %s64 = scalar_lea.smem %s0, 32
  %s65 = sld [smem:[%s64]]
  %s66 = scalar_lea.smem %s0, 33
  %s67 = sld [smem:[%s66]]
  %s68 = scalar_lea.smem %s0, 34
  %s69 = sld [smem:[%s68]]
  %s70 = scalar_lea.smem %s0, 35
  %s71 = sld [smem:[%s70]]
  %s72 = scalar_lea.smem %s0, 36
  %s73 = sld [smem:[%s72]]
  %74 = xla_tuple %s67, %s69, %s71, %s73
  %s75 = sld [smem:[#allocation0]]
  $region186: #{tpu_custom_call.1} parent=0
    _
  %s77 = ssub.s32 1, %s75
  %s78 = scalar_select 0, %s77, %s75
  $region1: #{tpu_custom_call.1} parent=0
    #allocation2 [shape = 'u8[8192]{0}', space=vmem, size = 0x2000, scoped, tag = 'input window, operand 0, single buffered']
    #allocation3 [shape = 's32[1]{0}', space=sflag, size = 0x4, scoped, tag = 'scoped memory for tpu_custom_call.1']
    #allocation4 [shape = 'u8[512]{0}', space=vmem, size = 0x400, scoped, tag = 'input window, operand 5, single buffered']
    #allocation5 [shape = 's32[1]{0}', space=sflag, size = 0x4, scoped, tag = 'scoped memory for tpu_custom_call.1']
    #allocation6 [shape = 'u8[512]{0}', space=vmem, size = 0x400, scoped, tag = 'input window, operand 8, single buffered']
    #allocation7 [shape = 'u8[512]{0}', space=vmem, size = 0x400, scoped, tag = 'input window, operand 13, single buffered']
    #allocation8 [shape = 's32[1]{0}', space=sflag, size = 0x4, scoped, tag = 'scoped memory for tpu_custom_call.1']
    #allocation9 [shape = 'u8[512]{0}', space=vmem, size = 0x400, scoped, tag = 'input window, operand 14, single buffered']
    %79 = vsyncpa [#allocation3], 0
    %80 = vsyncpa [#allocation5], 0
    %81 = vsyncpa [#allocation8], 0
    // Predicated region
    $region2: #{tpu_custom_call.1} parent=1 // pred_check
      _
    $region3: #{tpu_custom_call.1} parent=1 // pred_check_branch
      %83 = sbr.rel (0) target = $region5
    $region4: #{tpu_custom_call.1} parent=1 // pred_region
      %s85 = ssub.s32 256, 256
      %86 = vsyncadd [#allocation3], %s85
      %s87 = sshll.u32 [#allocation2], 4
      %s88 = int_to_ptr.vmem [resolvable:$true] %s87
      %93 = dma.hbm_to_vmem [thread:$0]  %s1, 256, %s88, [#allocation3], 128, 128, 8
    $region5: #{tpu_custom_call.1} parent=1 // pred_fallthru
      _
    // Predicated region
    $region6: #{tpu_custom_call.1} parent=1 // pred_check
      _
    $region7: #{tpu_custom_call.1} parent=1 // pred_check_branch
      %95 = sbr.rel (0) target = $region9
    $region8: #{tpu_custom_call.1} parent=1 // pred_region
      _
    $region9: #{tpu_custom_call.1} parent=1 // pred_fallthru
      _
    // Predicated region
    $region10: #{tpu_custom_call.1} parent=1 // pred_check
      _
    $region11: #{tpu_custom_call.1} parent=1 // pred_check_branch
      %97 = sbr.rel (0) target = $region13
    $region12: #{tpu_custom_call.1} parent=1 // pred_region
      _
    $region13: #{tpu_custom_call.1} parent=1 // pred_fallthru
      _
    // Predicated region
    $region14: #{tpu_custom_call.1} parent=1 // pred_check
      _
    $region15: #{tpu_custom_call.1} parent=1 // pred_check_branch
      %99 = sbr.rel (0) target = $region17
    $region16: #{tpu_custom_call.1} parent=1 // pred_region
      _
    $region17: #{tpu_custom_call.1} parent=1 // pred_fallthru
      _
    // Predicated region
    $region18: #{tpu_custom_call.1} parent=1 // pred_check
      _
    $region19: #{tpu_custom_call.1} parent=1 // pred_check_branch
      %101 = sbr.rel (0) target = $region21
    $region20: #{tpu_custom_call.1} parent=1 // pred_region
      _
    $region21: #{tpu_custom_call.1} parent=1 // pred_fallthru
      _
    // Predicated region
    $region22: #{tpu_custom_call.1} parent=1 // pred_check
      _
    $region23: #{tpu_custom_call.1} parent=1 // pred_check_branch
      %103 = sbr.rel (0) target = $region25
    $region24: #{tpu_custom_call.1} parent=1 // pred_region
      %s105 = ssub.s32 16, 16
      %106 = vsyncadd [#allocation5], %s105
      %s108 = sshll.u32 [#allocation4], 4
      %s109 = int_to_ptr.vmem [resolvable:$true] %s108
      %111 = dma.hbm_to_vmem [thread:$0]  %s11, 16, %s109, [#allocation5]
    $region25: #{tpu_custom_call.1} parent=1 // pred_fallthru
      _
    // Predicated region
    $region26: #{tpu_custom_call.1} parent=1 // pred_check
      _
    $region27: #{tpu_custom_call.1} parent=1 // pred_check_branch
      %113 = sbr.rel (0) target = $region29
    $region28: #{tpu_custom_call.1} parent=1 // pred_region
      _
    $region29: #{tpu_custom_call.1} parent=1 // pred_fallthru
      _
    // Predicated region
    $region30: #{tpu_custom_call.1} parent=1 // pred_check
      _
    $region31: #{tpu_custom_call.1} parent=1 // pred_check_branch
      %115 = sbr.rel (0) target = $region33
    $region32: #{tpu_custom_call.1} parent=1 // pred_region
      _
    $region33: #{tpu_custom_call.1} parent=1 // pred_fallthru
      _
    // Predicated region
    $region34: #{tpu_custom_call.1} parent=1 // pred_check
      _
    $region35: #{tpu_custom_call.1} parent=1 // pred_check_branch
      %117 = sbr.rel (0) target = $region37
    $region36: #{tpu_custom_call.1} parent=1 // pred_region
      %s119 = ssub.s32 16, 16
      %120 = vsyncadd [#allocation5], %s119
      %s122 = sshll.u32 [#allocation6], 4
      %s123 = int_to_ptr.vmem [resolvable:$true] %s122
      %125 = dma.hbm_to_vmem [thread:$0]  %s17, 16, %s123, [#allocation5]
    $region37: #{tpu_custom_call.1} parent=1 // pred_fallthru
      _
    // Predicated region
    $region38: #{tpu_custom_call.1} parent=1 // pred_check
      _
    $region39: #{tpu_custom_call.1} parent=1 // pred_check_branch
      %127 = sbr.rel (0) target = $region41
    $region40: #{tpu_custom_call.1} parent=1 // pred_region
      _
    $region41: #{tpu_custom_call.1} parent=1 // pred_fallthru
      _
    // Predicated region
    $region42: #{tpu_custom_call.1} parent=1 // pred_check
      _
    $region43: #{tpu_custom_call.1} parent=1 // pred_check_branch
      %129 = sbr.rel (0) target = $region45
    $region44: #{tpu_custom_call.1} parent=1 // pred_region
      _
    $region45: #{tpu_custom_call.1} parent=1 // pred_fallthru
      _
    // Predicated region
    $region46: #{tpu_custom_call.1} parent=1 // pred_check
      _
    $region47: #{tpu_custom_call.1} parent=1 // pred_check_branch
      %131 = sbr.rel (0) target = $region49
    $region48: #{tpu_custom_call.1} parent=1 // pred_region
      _
    $region49: #{tpu_custom_call.1} parent=1 // pred_fallthru
      _
    // Predicated region
    $region50: #{tpu_custom_call.1} parent=1 // pred_check
      _
    $region51: #{tpu_custom_call.1} parent=1 // pred_check_branch
      %133 = sbr.rel (0) target = $region53
    $region52: #{tpu_custom_call.1} parent=1 // pred_region
      _
    $region53: #{tpu_custom_call.1} parent=1 // pred_fallthru
      _
    // Predicated region
    $region54: #{tpu_custom_call.1} parent=1 // pred_check
      _
    $region55: #{tpu_custom_call.1} parent=1 // pred_check_branch
      %135 = sbr.rel (0) target = $region57
    $region56: #{tpu_custom_call.1} parent=1 // pred_region
      %s137 = ssub.s32 16, 16
      %138 = vsyncadd [#allocation8], %s137
      %s140 = sshll.u32 [#allocation7], 4
      %s141 = int_to_ptr.vmem [resolvable:$true] %s140
      %143 = dma.hbm_to_vmem [thread:$0]  %s27, 16, %s141, [#allocation8]
    $region57: #{tpu_custom_call.1} parent=1 // pred_fallthru
      _
    // Predicated region
    $region58: #{tpu_custom_call.1} parent=1 // pred_check
      _
    $region59: #{tpu_custom_call.1} parent=1 // pred_check_branch
      %145 = sbr.rel (0) target = $region61
    $region60: #{tpu_custom_call.1} parent=1 // pred_region
      %s147 = ssub.s32 16, 16
      %148 = vsyncadd [#allocation8], %s147
      %s150 = sshll.u32 [#allocation9], 4
      %s151 = int_to_ptr.vmem [resolvable:$true] %s150
      %153 = dma.hbm_to_vmem [thread:$0]  %s29, 16, %s151, [#allocation8]
    $region61: #{tpu_custom_call.1} parent=1 // pred_fallthru
      _
    // Predicated region
    $region62: #{tpu_custom_call.1} parent=1 // pred_check
      _
    $region63: #{tpu_custom_call.1} parent=1 // pred_check_branch
      %155 = sbr.rel (0) target = $region65
    $region64: #{tpu_custom_call.1} parent=1 // pred_region
      _
    $region65: #{tpu_custom_call.1} parent=1 // pred_fallthru
      _
    // Predicated region
    $region66: #{tpu_custom_call.1} parent=1 // pred_check
      _
    $region67: #{tpu_custom_call.1} parent=1 // pred_check_branch
      %157 = sbr.rel (0) target = $region69
    $region68: #{tpu_custom_call.1} parent=1 // pred_region
      _
    $region69: #{tpu_custom_call.1} parent=1 // pred_fallthru
      _
    // Predicated region
    $region70: #{tpu_custom_call.1} parent=1 // pred_check
      _
    $region71: #{tpu_custom_call.1} parent=1 // pred_check_branch
      %159 = sbr.rel (0) target = $region73
    $region72: #{tpu_custom_call.1} parent=1 // pred_region
      _
    $region73: #{tpu_custom_call.1} parent=1 // pred_fallthru
      _
    // Predicated region
    $region74: #{tpu_custom_call.1} parent=1 // pred_check
      _
    $region75: #{tpu_custom_call.1} parent=1 // pred_check_branch
      %161 = sbr.rel (0) target = $region77
    $region76: #{tpu_custom_call.1} parent=1 // pred_region
      _
    $region77: #{tpu_custom_call.1} parent=1 // pred_fallthru
      _
    // Predicated region
    $region78: #{tpu_custom_call.1} parent=1 // pred_check
      _
    $region79: #{tpu_custom_call.1} parent=1 // pred_check_branch
      %163 = sbr.rel (0) target = $region81
    $region80: #{tpu_custom_call.1} parent=1 // pred_region
      _
    $region81: #{tpu_custom_call.1} parent=1 // pred_fallthru
      _
    // Predicated region
    $region82: #{tpu_custom_call.1} parent=1 // pred_check
      _
    $region83: #{tpu_custom_call.1} parent=1 // pred_check_branch
      %165 = sbr.rel (0) target = $region85
    $region84: #{tpu_custom_call.1} parent=1 // pred_region
      _
    $region85: #{tpu_custom_call.1} parent=1 // pred_fallthru
      _
    // Predicated region
    $region86: #{tpu_custom_call.1} parent=1 // pred_check
      _
    $region87: #{tpu_custom_call.1} parent=1 // pred_check_branch
      %167 = sbr.rel (0) target = $region89
    $region88: #{tpu_custom_call.1} parent=1 // pred_region
      _
    $region89: #{tpu_custom_call.1} parent=1 // pred_fallthru
      _
    // Predicated region
    $region90: #{tpu_custom_call.1} parent=1 // pred_check
      _
    $region91: #{tpu_custom_call.1} parent=1 // pred_check_branch
      %169 = sbr.rel (0) target = $region93
    $region92: #{tpu_custom_call.1} parent=1 // pred_region
      _
    $region93: #{tpu_custom_call.1} parent=1 // pred_fallthru
      _
    // Predicated region
    $region94: #{tpu_custom_call.1} parent=1 // pred_check
      _
    $region95: #{tpu_custom_call.1} parent=1 // pred_check_branch
      %171 = sbr.rel (0) target = $region97
    $region96: #{tpu_custom_call.1} parent=1 // pred_region
      _
    $region97: #{tpu_custom_call.1} parent=1 // pred_fallthru
      _
    // Predicated region
    $region98: #{tpu_custom_call.1} parent=1 // pred_check
      _
    $region99: #{tpu_custom_call.1} parent=1 // pred_check_branch
      %173 = sbr.rel (0) target = $region101
    $region100: #{tpu_custom_call.1} parent=1 // pred_region
      _
    $region101: #{tpu_custom_call.1} parent=1 // pred_fallthru
      _
    // Predicated region
    $region102: #{tpu_custom_call.1} parent=1 // pred_check
      _
    $region103: #{tpu_custom_call.1} parent=1 // pred_check_branch
      %175 = sbr.rel (0) target = $region105
    $region104: #{tpu_custom_call.1} parent=1 // pred_region
      _
    $region105: #{tpu_custom_call.1} parent=1 // pred_fallthru
      _
    // Predicated region
    $region106: #{tpu_custom_call.1} parent=1 // pred_check
      _
    $region107: #{tpu_custom_call.1} parent=1 // pred_check_branch
      %177 = sbr.rel (0) target = $region109
    $region108: #{tpu_custom_call.1} parent=1 // pred_region
      _
    $region109: #{tpu_custom_call.1} parent=1 // pred_fallthru
      _
    // Predicated region
    $region110: #{tpu_custom_call.1} parent=1 // pred_check
      _
    $region111: #{tpu_custom_call.1} parent=1 // pred_check_branch
      %179 = sbr.rel (0) target = $region113
    $region112: #{tpu_custom_call.1} parent=1 // pred_region
      _
    $region113: #{tpu_custom_call.1} parent=1 // pred_fallthru
      _
    // Predicated region
    $region114: #{tpu_custom_call.1} parent=1 // pred_check
      _
    $region115: #{tpu_custom_call.1} parent=1 // pred_check_branch
      %181 = sbr.rel (0) target = $region117
    $region116: #{tpu_custom_call.1} parent=1 // pred_region
      _
    $region117: #{tpu_custom_call.1} parent=1 // pred_fallthru
      _
    // Predicated region
    $region118: #{tpu_custom_call.1} parent=1 // pred_check
      _
    $region119: #{tpu_custom_call.1} parent=1 // pred_check_branch
      %183 = sbr.rel (0) target = $region121
    $region120: #{tpu_custom_call.1} parent=1 // pred_region
      _
    $region121: #{tpu_custom_call.1} parent=1 // pred_fallthru
      _
    // Predicated region
    $region122: #{tpu_custom_call.1} parent=1 // pred_check
      _
    $region123: #{tpu_custom_call.1} parent=1 // pred_check_branch
      %185 = sbr.rel (0) target = $region125
    $region124: #{tpu_custom_call.1} parent=1 // pred_region
      _
    $region125: #{tpu_custom_call.1} parent=1 // pred_fallthru
      _
    // Predicated region
    $region126: #{tpu_custom_call.1} parent=1 // pred_check
      _
    $region127: #{tpu_custom_call.1} parent=1 // pred_check_branch
      %187 = sbr.rel (0) target = $region129
    $region128: #{tpu_custom_call.1} parent=1 // pred_region
      _
    $region129: #{tpu_custom_call.1} parent=1 // pred_fallthru
      _
    // Predicated region
    $region130: #{tpu_custom_call.1} parent=1 // pred_check
      _
    $region131: #{tpu_custom_call.1} parent=1 // pred_check_branch
      %189 = sbr.rel (0) target = $region133
    $region132: #{tpu_custom_call.1} parent=1 // pred_region
      _
    $region133: #{tpu_custom_call.1} parent=1 // pred_fallthru
      _
    // Predicated region
    $region134: #{tpu_custom_call.1} parent=1 // pred_check
      _
    $region135: #{tpu_custom_call.1} parent=1 // pred_check_branch
      %191 = sbr.rel (0) target = $region137
    $region136: #{tpu_custom_call.1} parent=1 // pred_region
      %192 = dma.done [#allocation3], 256
    $region137: #{tpu_custom_call.1} parent=1 // pred_fallthru
      _
    // Predicated region
    $region138: #{tpu_custom_call.1} parent=1 // pred_check
      _
    $region139: #{tpu_custom_call.1} parent=1 // pred_check_branch
      %194 = sbr.rel (0) target = $region141
    $region140: #{tpu_custom_call.1} parent=1 // pred_region
      %195 = dma.done [#allocation5], 16
    $region141: #{tpu_custom_call.1} parent=1 // pred_fallthru
      _
    // Predicated region
    $region142: #{tpu_custom_call.1} parent=1 // pred_check
      _
    $region143: #{tpu_custom_call.1} parent=1 // pred_check_branch
      %197 = sbr.rel (0) target = $region145
    $region144: #{tpu_custom_call.1} parent=1 // pred_region
      %198 = dma.done [#allocation5], 16
    $region145: #{tpu_custom_call.1} parent=1 // pred_fallthru
      _
    // Predicated region
    $region146: #{tpu_custom_call.1} parent=1 // pred_check
      _
    $region147: #{tpu_custom_call.1} parent=1 // pred_check_branch
      %200 = sbr.rel (0) target = $region149
    $region148: #{tpu_custom_call.1} parent=1 // pred_region
      %201 = dma.done [#allocation8], 16
    $region149: #{tpu_custom_call.1} parent=1 // pred_fallthru
      _
    // Predicated region
    $region150: #{tpu_custom_call.1} parent=1 // pred_check
      _
    $region151: #{tpu_custom_call.1} parent=1 // pred_check_branch
      %203 = sbr.rel (0) target = $region153
    $region152: #{tpu_custom_call.1} parent=1 // pred_region
      %204 = dma.done [#allocation8], 16
    $region153: #{tpu_custom_call.1} parent=1 // pred_fallthru
      _
    %v205 = vld [vmem:[#allocation2] sm:$0xff]
    %v206 = vld [vmem:[#allocation2 + $0x8] sm:$0xf]
    %v207 = vld [vmem:[%s15] sm:$0xff]
    %v208 = vld [vmem:[%s15 + $0x8] sm:$0xff]
    %v209 = vld [vmem:[#allocation6] sm:$0x1]
    %v211 = vlaneseq
    %v212 = vshrl.u32 %v211, 7
    %v213 = vsub.s32 0, %v212
    %v214 = vrot.slane %v209, %v213
    %vm216 = vcmask 130048
    %v218 = vsel %vm216, %v205, 0
    %v221 = vsel %vm216, %v206, 0
    %223 = vmatprep.subr.mxu0 0.0
    %224 = vmatpush1.msra.mxu0 %v207
    %225 = vmatprep.subr.mxu0 0.0
    %226 = vmatpush1.msra.mxu0 %v208
    %227 = vmatprep.subr.mxu0 0.0
    %228 = vmatpush1.msra.mxu0 0.0
    %229 = vmatprep.subr.mxu0 0.0
    %230 = vmatpush1.msra.mxu0 0.0
    %231 = vmatprep.subr.mxu0 0.0
    %232 = vmatpush1.msra.mxu0 0.0
    %233 = vmatprep.subr.mxu0 0.0
    %234 = vmatpush1.msra.mxu0 0.0
    %235 = vmatprep.subr.mxu0 0.0
    %236 = vmatpush1.msra.mxu0 0.0
    %237 = vmatprep.subr.mxu0 0.0
    %238 = vmatpush1.msra.mxu0 0.0
    %239 = vmatprep.subr.mxu0 0.0
    %240 = vmatpush1.msra.mxu0 0.0
    %241 = vmatprep.subr.mxu0 0.0
    %242 = vmatpush1.msra.mxu0 0.0
    %243 = vmatprep.subr.mxu0 0.0
    %244 = vmatpush1.msra.mxu0 0.0
    %245 = vmatprep.subr.mxu0 0.0
    %246 = vmatpush1.msra.mxu0 0.0
    %247 = vmatprep.subr.mxu0 0.0
    %248 = vmatpush1.msra.mxu0 0.0
    %249 = vmatprep.subr.mxu0 0.0
    %250 = vmatpush1.msra.mxu0 0.0
    %251 = vmatprep.subr.mxu0 0.0
    %252 = vmatpush1.msra.mxu0 0.0
    %253 = vmatprep.subr.mxu0 0.0
    %254 = vmatpush1.msra.mxu0 0.0
    %255 = vmatprep.subr.mxu0 0.0
    %256 = vmatpush1.msra.mxu0 0.0
    %257 = vmatprep.subr.mxu0 0.0
    %258 = vmatpush1.msra.mxu0 0.0
    %259 = vmatprep.subr.mxu0 0.0
    %260 = vmatpush1.msra.mxu0 0.0
    %261 = vmatprep.subr.mxu0 0.0
    %262 = vmatpush1.msra.mxu0 0.0
    %263 = vmatprep.subr.mxu0 0.0
    %264 = vmatpush1.msra.mxu0 0.0
    %265 = vmatprep.subr.mxu0 0.0
    %266 = vmatpush1.msra.mxu0 0.0
    %267 = vmatprep.subr.mxu0 0.0
    %268 = vmatpush1.msra.mxu0 0.0
    %269 = vmatprep.subr.mxu0 0.0
    %270 = vmatpush1.msra.mxu0 0.0
    %271 = vmatprep.subr.mxu0 0.0
    %272 = vmatpush1.msra.mxu0 0.0
    %273 = vmatprep.subr.mxu0 0.0
    %274 = vmatpush1.msra.mxu0 0.0
    %275 = vmatprep.subr.mxu0 0.0
    %276 = vmatpush1.msra.mxu0 0.0
    %277 = vmatprep.subr.mxu0 0.0
    %278 = vmatpush1.msra.mxu0 0.0
    %279 = vmatprep.subr.mxu0 0.0
    %280 = vmatpush1.msra.mxu0 0.0
    %281 = vmatprep.subr.mxu0 0.0
    %282 = vmatpush1.msra.mxu0 0.0
    %283 = vmatprep.subr.mxu0 0.0
    %284 = vmatpush1.msra.mxu0 0.0
    %285 = vmatprep.subr.mxu0 0.0
    %286 = vmatpush1.msra.mxu0 0.0
    %287 = vmatprep.mubr.f32.mxu0 0.0
    %288 = vmatmul.mubr.f32.gmra.mrb[0].mxu0 %v218
    %v289 = vpop.f32.mrb[0].mxu0
    %v290 = vadd.f32 %v214, %v289
    %v291 = vpop.f32.mrb[0].mxu0
    %292 = vmatprep.mubr.f32.mxu0 0.0
    %293 = vmatmul.mubr.f32.gmra.mrb[0].mxu0 %v221
    %v294 = vpop.f32.mrb[0].mxu0
    %v295 = vadd.f32 %v214, %v294
    %v296 = vpop.f32.mrb[0].mxu0
    %297 = vdwg.mxu0
    %v298 = vld [vmem:[%s19] sm:$0x1]
    %v299 = vld [vmem:[%s21] sm:$0x1]
    %vm300 = vcmask 261120
    %v301 = vsel %vm300, %v290, 0.0
    %302 = vadd.xlane.f32.xlu0 %v301
    %v303 = vpop.xlane.xlu0 %302
    %vm304 = vcmask 257024
    %v305 = vsel %vm304, %v295, 0.0
    %306 = vadd.xlane.f32.xlu0 %v305
    %v307 = vpop.xlane.xlu0 %306
    %v308 = vrcp.pop 32.0
    %v309 = vmul.f32 %v303, %v308
    %v310 = vmul.f32 %v307, %v308
    %v311 = vsub.f32 %v290, %v309
    %v312 = vsub.f32 %v295, %v310
    %v313 = vmul.f32 %v311, %v311
    %v314 = vmul.f32 %v312, %v312
    %v315 = vsel %vm300, %v313, 0.0
    %316 = vadd.xlane.f32.xlu0 %v315
    %v317 = vpop.xlane.xlu0 %316
    %v318 = vsel %vm304, %v314, 0.0
    %319 = vadd.xlane.f32.xlu0 %v318
    %v320 = vpop.xlane.xlu0 %319
    %v321 = vmul.f32 %v317, %v308
    %v322 = vmul.f32 %v320, %v308
    %v323 = vadd.f32 %v321, 1e-05
    %v324 = vadd.f32 %v322, 1e-05
    %v325 = vrsqrt.pop %v323
    %v326 = vrsqrt.pop %v324
    %v327 = vmul.f32 %v311, %v325
    %v328 = vmul.f32 %v312, %v326
    %v330 = vlaneseq
    %v331 = vshrl.u32 %v330, 7
    %v332 = vsub.s32 0, %v331
    %v333 = vrot.slane %v298, %v332
    %v335 = vmul.f32 %v327, %v333
    %v336 = vmul.f32 %v328, %v333
    %v338 = vlaneseq
    %v339 = vshrl.u32 %v338, 7
    %v340 = vsub.s32 0, %v339
    %v341 = vrot.slane %v299, %v340
    %v343 = vadd.f32 %v335, %v341
    %v344 = vadd.f32 %v336, %v341
    %v345 = vmul.f32 %v343, 0.5
    %v346 = vmul.f32 %v344, 0.5
    %v347 = vmul.f32 %v343, 0.70710677
    %v348 = vmul.f32 %v344, 0.70710677
    %v349 = verf.f32.pop %v347
    %v350 = verf.f32.pop %v348
    %v351 = vadd.f32 %v349, 1.0
    %v352 = vadd.f32 %v350, 1.0
    %v353 = vmul.f32 %v345, %v351
    %v354 = vmul.f32 %v346, %v352
    %v355 = vld [vmem:[%s23] sm:$0xff]
    %v356 = vld [vmem:[%s23 + $0x8] sm:$0xff]
    %v357 = vld [vmem:[%s23 + $0x10] sm:$0xff]
    %v358 = vld [vmem:[%s23 + $0x18] sm:$0xff]
    %v359 = vld [vmem:[%s25] sm:$0x1]
    %v361 = vlaneseq
    %v362 = vshrl.u32 %v361, 7
    %v363 = vsub.s32 0, %v362
    %v364 = vrot.slane %v359, %v363
    %v367 = vsel %vm300, %v353, 0
    %v370 = vsel %vm300, %v354, 0
    %372 = vmatprep.subr.mxu0 0.0
    %373 = vmatpush1.msra.mxu0 %v355
    %374 = vmatprep.subr.mxu0 0.0
    %375 = vmatpush1.msra.mxu0 %v356
    %376 = vmatprep.subr.mxu0 0.0
    %377 = vmatpush1.msra.mxu0 %v357
    %378 = vmatprep.subr.mxu0 0.0
    %379 = vmatpush1.msra.mxu0 %v358
    %380 = vmatprep.subr.mxu0 0.0
    %381 = vmatpush1.msra.mxu0 0.0
    %382 = vmatprep.subr.mxu0 0.0
    %383 = vmatpush1.msra.mxu0 0.0
    %384 = vmatprep.subr.mxu0 0.0
    %385 = vmatpush1.msra.mxu0 0.0
    %386 = vmatprep.subr.mxu0 0.0
    %387 = vmatpush1.msra.mxu0 0.0
    %388 = vmatprep.subr.mxu0 0.0
    %389 = vmatpush1.msra.mxu0 0.0
    %390 = vmatprep.subr.mxu0 0.0
    %391 = vmatpush1.msra.mxu0 0.0
    %392 = vmatprep.subr.mxu0 0.0
    %393 = vmatpush1.msra.mxu0 0.0
    %394 = vmatprep.subr.mxu0 0.0
    %395 = vmatpush1.msra.mxu0 0.0
    %396 = vmatprep.subr.mxu0 0.0
    %397 = vmatpush1.msra.mxu0 0.0
    %398 = vmatprep.subr.mxu0 0.0
    %399 = vmatpush1.msra.mxu0 0.0
    %400 = vmatprep.subr.mxu0 0.0
    %401 = vmatpush1.msra.mxu0 0.0
    %402 = vmatprep.subr.mxu0 0.0
    %403 = vmatpush1.msra.mxu0 0.0
    %404 = vmatprep.subr.mxu0 0.0
    %405 = vmatpush1.msra.mxu0 0.0
    %406 = vmatprep.subr.mxu0 0.0
    %407 = vmatpush1.msra.mxu0 0.0
    %408 = vmatprep.subr.mxu0 0.0
    %409 = vmatpush1.msra.mxu0 0.0
    %410 = vmatprep.subr.mxu0 0.0
    %411 = vmatpush1.msra.mxu0 0.0
    %412 = vmatprep.subr.mxu0 0.0
    %413 = vmatpush1.msra.mxu0 0.0
    %414 = vmatprep.subr.mxu0 0.0
    %415 = vmatpush1.msra.mxu0 0.0
    %416 = vmatprep.subr.mxu0 0.0
    %417 = vmatpush1.msra.mxu0 0.0
    %418 = vmatprep.subr.mxu0 0.0
    %419 = vmatpush1.msra.mxu0 0.0
    %420 = vmatprep.subr.mxu0 0.0
    %421 = vmatpush1.msra.mxu0 0.0
    %422 = vmatprep.subr.mxu0 0.0
    %423 = vmatpush1.msra.mxu0 0.0
    %424 = vmatprep.subr.mxu0 0.0
    %425 = vmatpush1.msra.mxu0 0.0
    %426 = vmatprep.subr.mxu0 0.0
    %427 = vmatpush1.msra.mxu0 0.0
    %428 = vmatprep.subr.mxu0 0.0
    %429 = vmatpush1.msra.mxu0 0.0
    %430 = vmatprep.subr.mxu0 0.0
    %431 = vmatpush1.msra.mxu0 0.0
    %432 = vmatprep.subr.mxu0 0.0
    %433 = vmatpush1.msra.mxu0 0.0
    %434 = vmatprep.subr.mxu0 0.0
    %435 = vmatpush1.msra.mxu0 0.0
    %436 = vmatprep.mubr.f32.mxu0 0.0
    %437 = vmatmul.mubr.f32.gmra.mrb[0].mxu0 %v367
    %v438 = vpop.f32.mrb[0].mxu0
    %v439 = vadd.f32 %v364, %v438
    %v440 = vpop.f32.mrb[0].mxu0
    %441 = vmatprep.mubr.f32.mxu0 0.0
    %442 = vmatmul.mubr.f32.gmra.mrb[0].mxu0 %v370
    %v443 = vpop.f32.mrb[0].mxu0
    %v444 = vadd.f32 %v364, %v443
    %v445 = vpop.f32.mrb[0].mxu0
    %446 = vdwg.mxu0
    %v447 = vld [vmem:[#allocation7] sm:$0x1]
    %v448 = vld [vmem:[#allocation9] sm:$0x1]
    %v449 = vsel %vm300, %v439, 0.0
    %450 = vadd.xlane.f32.xlu0 %v449
    %v451 = vpop.xlane.xlu0 %450
    %v452 = vsel %vm304, %v444, 0.0
    %453 = vadd.xlane.f32.xlu0 %v452
    %v454 = vpop.xlane.xlu0 %453
    %v455 = vmul.f32 %v451, %v308
    %v456 = vmul.f32 %v454, %v308
    %v457 = vsub.f32 %v439, %v455
    %v458 = vsub.f32 %v444, %v456
    %v459 = vmul.f32 %v457, %v457
    %v460 = vmul.f32 %v458, %v458
    %v461 = vsel %vm300, %v459, 0.0
    %462 = vadd.xlane.f32.xlu0 %v461
    %v463 = vpop.xlane.xlu0 %462
    %v464 = vsel %vm304, %v460, 0.0
    %465 = vadd.xlane.f32.xlu0 %v464
    %v466 = vpop.xlane.xlu0 %465
    %v467 = vmul.f32 %v463, %v308
    %v468 = vmul.f32 %v466, %v308
    %v469 = vadd.f32 %v467, 1e-05
    %v470 = vadd.f32 %v468, 1e-05
    %v471 = vrsqrt.pop %v469
    %v472 = vrsqrt.pop %v470
    %v473 = vmul.f32 %v457, %v471
    %v474 = vmul.f32 %v458, %v472
    %v476 = vlaneseq
    %v477 = vshrl.u32 %v476, 7
    %v478 = vsub.s32 0, %v477
    %v479 = vrot.slane %v447, %v478
    %v481 = vmul.f32 %v473, %v479
    %v482 = vmul.f32 %v474, %v479
    %v484 = vlaneseq
    %v485 = vshrl.u32 %v484, 7
    %v486 = vsub.s32 0, %v485
    %v487 = vrot.slane %v448, %v486
    %v489 = vadd.f32 %v481, %v487
    %v490 = vadd.f32 %v482, %v487
    %v491 = vmul.f32 %v489, 0.5
    %v492 = vmul.f32 %v490, 0.5
    %v493 = vmul.f32 %v489, 0.70710677
    %v494 = vmul.f32 %v490, 0.70710677
    %v495 = verf.f32.pop %v493
    %v496 = verf.f32.pop %v494
    %v497 = vadd.f32 %v495, 1.0
    %v498 = vadd.f32 %v496, 1.0
    %v499 = vmul.f32 %v491, %v497
    %v500 = vmul.f32 %v492, %v498
    %v501 = vlaneseq
    %v502 = vand.u32 %v501, 127
    %v503 = vld [vmem:[%s7] sm:$0xff]
    %v504 = vld [vmem:[%s7 + $0x8] sm:$0xff]
    %v505 = vld [vmem:[%s7 + $0x10] sm:$0xff]
    %506 = vset.pattern.permute.xlu0 0
    %507 = vperm.xlu0 %506, %v503
    %v508 = vpop.permute.xlu0 %507
    %509 = vset.pattern.permute.xlu0 0
    %510 = vperm.xlu0 %509, %v504
    %v511 = vpop.permute.xlu0 %510
    %512 = vset.pattern.permute.xlu0 0
    %513 = vperm.xlu0 %512, %v505
    %v514 = vpop.permute.xlu0 %513
    %vm515 = vcmp.eq.s32.totalorder %v502, %v508
    %vm516 = vcmp.eq.s32.totalorder %v502, %v511
    %vm517 = vcmp.eq.s32.totalorder %v502, %v514
    %v518 = vsel %vm515, 1.0, 0.0
    %v519 = vsel %vm516, 1.0, 0.0
    %v520 = vsel %vm517, 1.0, 0.0
    %v521 = vld [vmem:[%s9] sm:$0xff]
    %v522 = vld [vmem:[%s9 + $0x8] sm:$0xff]
    %v523 = vld [vmem:[%s9 + $0x10] sm:$0xff]
    %524 = vset.pattern.permute.xlu0 0
    %525 = vperm.xlu0 %524, %v521
    %v526 = vpop.permute.xlu0 %525
    %527 = vset.pattern.permute.xlu0 0
    %528 = vperm.xlu0 %527, %v522
    %v529 = vpop.permute.xlu0 %528
    %530 = vset.pattern.permute.xlu0 0
    %531 = vperm.xlu0 %530, %v523
    %v532 = vpop.permute.xlu0 %531
    %vm533 = vcmp.eq.s32.totalorder %v502, %v526
    %vm534 = vcmp.eq.s32.totalorder %v502, %v529
    %vm535 = vcmp.eq.s32.totalorder %v502, %v532
    %v536 = vsel %vm533, 1.0, 0.0
    %v537 = vsel %vm534, 1.0, 0.0
    %v538 = vsel %vm535, 1.0, 0.0
    %vm539 = vcmask 97280
    %v541 = vsel %vm539, %v518, 0
    %v544 = vsel %vm539, %v519, 0
    %v547 = vsel %vm539, %v520, 0
    %vm549 = vcmask 1043456
    %v551 = vsel %vm549, %v500, 0
    %553 = vmatprep.subr.mxu0 0.0
    %554 = vmatpush1.msra.mxu0 %v499
    %555 = vmatprep.subr.mxu0 0.0
    %556 = vmatpush1.msra.mxu0 %v551
    %557 = vmatprep.subr.mxu0 0.0
    %558 = vmatpush1.msra.mxu0 0.0
    %559 = vmatprep.subr.mxu0 0.0
    %560 = vmatpush1.msra.mxu0 0.0
    %561 = vmatprep.subr.mxu0 0.0
    %562 = vmatpush1.msra.mxu0 0.0
    %563 = vmatprep.subr.mxu0 0.0
    %564 = vmatpush1.msra.mxu0 0.0
    %565 = vmatprep.subr.mxu0 0.0
    %566 = vmatpush1.msra.mxu0 0.0
    %567 = vmatprep.subr.mxu0 0.0
    %568 = vmatpush1.msra.mxu0 0.0
    %569 = vmatprep.subr.mxu0 0.0
    %570 = vmatpush1.msra.mxu0 0.0
    %571 = vmatprep.subr.mxu0 0.0
    %572 = vmatpush1.msra.mxu0 0.0
    %573 = vmatprep.subr.mxu0 0.0
    %574 = vmatpush1.msra.mxu0 0.0
    %575 = vmatprep.subr.mxu0 0.0
    %576 = vmatpush1.msra.mxu0 0.0
    %577 = vmatprep.subr.mxu0 0.0
    %578 = vmatpush1.msra.mxu0 0.0
    %579 = vmatprep.subr.mxu0 0.0
    %580 = vmatpush1.msra.mxu0 0.0
    %581 = vmatprep.subr.mxu0 0.0
    %582 = vmatpush1.msra.mxu0 0.0
    %583 = vmatprep.subr.mxu0 0.0
    %584 = vmatpush1.msra.mxu0 0.0
    %585 = vmatprep.subr.mxu0 0.0
    %586 = vmatpush1.msra.mxu0 0.0
    %587 = vmatprep.subr.mxu0 0.0
    %588 = vmatpush1.msra.mxu0 0.0
    %589 = vmatprep.subr.mxu0 0.0
    %590 = vmatpush1.msra.mxu0 0.0
    %591 = vmatprep.subr.mxu0 0.0
    %592 = vmatpush1.msra.mxu0 0.0
    %593 = vmatprep.subr.mxu0 0.0
    %594 = vmatpush1.msra.mxu0 0.0
    %595 = vmatprep.subr.mxu0 0.0
    %596 = vmatpush1.msra.mxu0 0.0
    %597 = vmatprep.subr.mxu0 0.0
    %598 = vmatpush1.msra.mxu0 0.0
    %599 = vmatprep.subr.mxu0 0.0
    %600 = vmatpush1.msra.mxu0 0.0
    %601 = vmatprep.subr.mxu0 0.0
    %602 = vmatpush1.msra.mxu0 0.0
    %603 = vmatprep.subr.mxu0 0.0
    %604 = vmatpush1.msra.mxu0 0.0
    %605 = vmatprep.subr.mxu0 0.0
    %606 = vmatpush1.msra.mxu0 0.0
    %607 = vmatprep.subr.mxu0 0.0
    %608 = vmatpush1.msra.mxu0 0.0
    %609 = vmatprep.subr.mxu0 0.0
    %610 = vmatpush1.msra.mxu0 0.0
    %611 = vmatprep.subr.mxu0 0.0
    %612 = vmatpush1.msra.mxu0 0.0
    %613 = vmatprep.subr.mxu0 0.0
    %614 = vmatpush1.msra.mxu0 0.0
    %615 = vmatprep.subr.mxu0 0.0
    %616 = vmatpush1.msra.mxu0 0.0
    %617 = vmatprep.mubr.f32.mxu0 0.0
    %618 = vmatmul.mubr.f32.gmra.mrb[0].mxu0 %v541
    %v619 = vpop.f32.mrb[0].mxu0
    %v620 = vadd.f32 0.0, %v619
    %v621 = vpop.f32.mrb[0].mxu0
    %622 = vmatprep.mubr.f32.mxu0 0.0
    %623 = vmatmul.mubr.f32.gmra.mrb[0].mxu0 %v544
    %v624 = vpop.f32.mrb[0].mxu0
    %v625 = vadd.f32 0.0, %v624
    %v626 = vpop.f32.mrb[0].mxu0
    %627 = vmatprep.mubr.f32.mxu0 0.0
    %628 = vmatmul.mubr.f32.gmra.mrb[0].mxu0 %v547
    %v629 = vpop.f32.mrb[0].mxu0
    %v630 = vadd.f32 0.0, %v629
    %v631 = vpop.f32.mrb[0].mxu0
    %632 = vdwg.mxu0
    %v634 = vsel %vm539, %v536, 0
    %v637 = vsel %vm539, %v537, 0
    %v640 = vsel %vm539, %v538, 0
    %642 = vmatprep.subr.mxu0 0.0
    %643 = vmatpush1.msra.mxu0 %v499
    %644 = vmatprep.subr.mxu0 0.0
    %645 = vmatpush1.msra.mxu0 %v551
    %646 = vmatprep.subr.mxu0 0.0
    %647 = vmatpush1.msra.mxu0 0.0
    %648 = vmatprep.subr.mxu0 0.0
    %649 = vmatpush1.msra.mxu0 0.0
    %650 = vmatprep.subr.mxu0 0.0
    %651 = vmatpush1.msra.mxu0 0.0
    %652 = vmatprep.subr.mxu0 0.0
    %653 = vmatpush1.msra.mxu0 0.0
    %654 = vmatprep.subr.mxu0 0.0
    %655 = vmatpush1.msra.mxu0 0.0
    %656 = vmatprep.subr.mxu0 0.0
    %657 = vmatpush1.msra.mxu0 0.0
    %658 = vmatprep.subr.mxu0 0.0
    %659 = vmatpush1.msra.mxu0 0.0
    %660 = vmatprep.subr.mxu0 0.0
    %661 = vmatpush1.msra.mxu0 0.0
    %662 = vmatprep.subr.mxu0 0.0
    %663 = vmatpush1.msra.mxu0 0.0
    %664 = vmatprep.subr.mxu0 0.0
    %665 = vmatpush1.msra.mxu0 0.0
    %666 = vmatprep.subr.mxu0 0.0
    %667 = vmatpush1.msra.mxu0 0.0
    %668 = vmatprep.subr.mxu0 0.0
    %669 = vmatpush1.msra.mxu0 0.0
    %670 = vmatprep.subr.mxu0 0.0
    %671 = vmatpush1.msra.mxu0 0.0
    %672 = vmatprep.subr.mxu0 0.0
    %673 = vmatpush1.msra.mxu0 0.0
    %674 = vmatprep.subr.mxu0 0.0
    %675 = vmatpush1.msra.mxu0 0.0
    %676 = vmatprep.subr.mxu0 0.0
    %677 = vmatpush1.msra.mxu0 0.0
    %678 = vmatprep.subr.mxu0 0.0
    %679 = vmatpush1.msra.mxu0 0.0
    %680 = vmatprep.subr.mxu0 0.0
    %681 = vmatpush1.msra.mxu0 0.0
    %682 = vmatprep.subr.mxu0 0.0
    %683 = vmatpush1.msra.mxu0 0.0
    %684 = vmatprep.subr.mxu0 0.0
    %685 = vmatpush1.msra.mxu0 0.0
    %686 = vmatprep.subr.mxu0 0.0
    %687 = vmatpush1.msra.mxu0 0.0
    %688 = vmatprep.subr.mxu0 0.0
    %689 = vmatpush1.msra.mxu0 0.0
    %690 = vmatprep.subr.mxu0 0.0
    %691 = vmatpush1.msra.mxu0 0.0
    %692 = vmatprep.subr.mxu0 0.0
    %693 = vmatpush1.msra.mxu0 0.0
    %694 = vmatprep.subr.mxu0 0.0
    %695 = vmatpush1.msra.mxu0 0.0
    %696 = vmatprep.subr.mxu0 0.0
    %697 = vmatpush1.msra.mxu0 0.0
    %698 = vmatprep.subr.mxu0 0.0
    %699 = vmatpush1.msra.mxu0 0.0
    %700 = vmatprep.subr.mxu0 0.0
    %701 = vmatpush1.msra.mxu0 0.0
    %702 = vmatprep.subr.mxu0 0.0
    %703 = vmatpush1.msra.mxu0 0.0
    %704 = vmatprep.subr.mxu0 0.0
    %705 = vmatpush1.msra.mxu0 0.0
    %706 = vmatprep.mubr.f32.mxu0 0.0
    %707 = vmatmul.mubr.f32.gmra.mrb[0].mxu0 %v634
    %v708 = vpop.f32.mrb[0].mxu0
    %v709 = vadd.f32 0.0, %v708
    %v710 = vpop.f32.mrb[0].mxu0
    %711 = vmatprep.mubr.f32.mxu0 0.0
    %712 = vmatmul.mubr.f32.gmra.mrb[0].mxu0 %v637
    %v713 = vpop.f32.mrb[0].mxu0
    %v714 = vadd.f32 0.0, %v713
    %v715 = vpop.f32.mrb[0].mxu0
    %716 = vmatprep.mubr.f32.mxu0 0.0
    %717 = vmatmul.mubr.f32.gmra.mrb[0].mxu0 %v640
    %v718 = vpop.f32.mrb[0].mxu0
    %v719 = vadd.f32 0.0, %v718
    %v720 = vpop.f32.mrb[0].mxu0
    %721 = vdwg.mxu0
    %v722 = vld [vmem:[%s5] sm:$0xff]
    %v723 = vld [vmem:[%s5 + $0x8] sm:$0xf]
    %v725 = vsel %vm549, %v723, 0
    %727 = vmatprep.subr.mxu0 0.0
    %728 = vmatpush1.msra.mxu0 %v722
    %729 = vmatprep.subr.mxu0 0.0
    %730 = vmatpush1.msra.mxu0 %v725
    %731 = vmatprep.subr.mxu0 0.0
    %732 = vmatpush1.msra.mxu0 0.0
    %733 = vmatprep.subr.mxu0 0.0
    %734 = vmatpush1.msra.mxu0 0.0
    %735 = vmatprep.subr.mxu0 0.0
    %736 = vmatpush1.msra.mxu0 0.0
    %737 = vmatprep.subr.mxu0 0.0
    %738 = vmatpush1.msra.mxu0 0.0
    %739 = vmatprep.subr.mxu0 0.0
    %740 = vmatpush1.msra.mxu0 0.0
    %741 = vmatprep.subr.mxu0 0.0
    %742 = vmatpush1.msra.mxu0 0.0
    %743 = vmatprep.subr.mxu0 0.0
    %744 = vmatpush1.msra.mxu0 0.0
    %745 = vmatprep.subr.mxu0 0.0
    %746 = vmatpush1.msra.mxu0 0.0
    %747 = vmatprep.subr.mxu0 0.0
    %748 = vmatpush1.msra.mxu0 0.0
    %749 = vmatprep.subr.mxu0 0.0
    %750 = vmatpush1.msra.mxu0 0.0
    %751 = vmatprep.subr.mxu0 0.0
    %752 = vmatpush1.msra.mxu0 0.0
    %753 = vmatprep.subr.mxu0 0.0
    %754 = vmatpush1.msra.mxu0 0.0
    %755 = vmatprep.subr.mxu0 0.0
    %756 = vmatpush1.msra.mxu0 0.0
    %757 = vmatprep.subr.mxu0 0.0
    %758 = vmatpush1.msra.mxu0 0.0
    %759 = vmatprep.subr.mxu0 0.0
    %760 = vmatpush1.msra.mxu0 0.0
    %761 = vmatprep.subr.mxu0 0.0
    %762 = vmatpush1.msra.mxu0 0.0
    %763 = vmatprep.subr.mxu0 0.0
    %764 = vmatpush1.msra.mxu0 0.0
    %765 = vmatprep.subr.mxu0 0.0
    %766 = vmatpush1.msra.mxu0 0.0
    %767 = vmatprep.subr.mxu0 0.0
    %768 = vmatpush1.msra.mxu0 0.0
    %769 = vmatprep.subr.mxu0 0.0
    %770 = vmatpush1.msra.mxu0 0.0
    %771 = vmatprep.subr.mxu0 0.0
    %772 = vmatpush1.msra.mxu0 0.0
    %773 = vmatprep.subr.mxu0 0.0
    %774 = vmatpush1.msra.mxu0 0.0
    %775 = vmatprep.subr.mxu0 0.0
    %776 = vmatpush1.msra.mxu0 0.0
    %777 = vmatprep.subr.mxu0 0.0
    %778 = vmatpush1.msra.mxu0 0.0
    %779 = vmatprep.subr.mxu0 0.0
    %780 = vmatpush1.msra.mxu0 0.0
    %781 = vmatprep.subr.mxu0 0.0
    %782 = vmatpush1.msra.mxu0 0.0
    %783 = vmatprep.subr.mxu0 0.0
    %784 = vmatpush1.msra.mxu0 0.0
    %785 = vmatprep.subr.mxu0 0.0
    %786 = vmatpush1.msra.mxu0 0.0
    %787 = vmatprep.subr.mxu0 0.0
    %788 = vmatpush1.msra.mxu0 0.0
    %789 = vmatprep.subr.mxu0 0.0
    %790 = vmatpush1.msra.mxu0 0.0
    %791 = vmatprep.mubr.f32.mxu0 0.0
    %792 = vmatmul.mubr.f32.gmra.mrb[0].mxu0 %v541
    %v793 = vpop.f32.mrb[0].mxu0
    %v794 = vadd.f32 0.0, %v793
    %v795 = vpop.f32.mrb[0].mxu0
    %796 = vmatprep.mubr.f32.mxu0 0.0
    %797 = vmatmul.mubr.f32.gmra.mrb[0].mxu0 %v544
    %v798 = vpop.f32.mrb[0].mxu0
    %v799 = vadd.f32 0.0, %v798
    %v800 = vpop.f32.mrb[0].mxu0
    %801 = vmatprep.mubr.f32.mxu0 0.0
    %802 = vmatmul.mubr.f32.gmra.mrb[0].mxu0 %v547
    %v803 = vpop.f32.mrb[0].mxu0
    %v804 = vadd.f32 0.0, %v803
    %v805 = vpop.f32.mrb[0].mxu0
    %806 = vdwg.mxu0
    %807 = vmatprep.subr.mxu0 0.0
    %808 = vmatpush1.msra.mxu0 %v722
    %809 = vmatprep.subr.mxu0 0.0
    %810 = vmatpush1.msra.mxu0 %v725
    %811 = vmatprep.subr.mxu0 0.0
    %812 = vmatpush1.msra.mxu0 0.0
    %813 = vmatprep.subr.mxu0 0.0
    %814 = vmatpush1.msra.mxu0 0.0
    %815 = vmatprep.subr.mxu0 0.0
    %816 = vmatpush1.msra.mxu0 0.0
    %817 = vmatprep.subr.mxu0 0.0
    %818 = vmatpush1.msra.mxu0 0.0
    %819 = vmatprep.subr.mxu0 0.0
    %820 = vmatpush1.msra.mxu0 0.0
    %821 = vmatprep.subr.mxu0 0.0
    %822 = vmatpush1.msra.mxu0 0.0
    %823 = vmatprep.subr.mxu0 0.0
    %824 = vmatpush1.msra.mxu0 0.0
    %825 = vmatprep.subr.mxu0 0.0
    %826 = vmatpush1.msra.mxu0 0.0
    %827 = vmatprep.subr.mxu0 0.0
    %828 = vmatpush1.msra.mxu0 0.0
    %829 = vmatprep.subr.mxu0 0.0
    %830 = vmatpush1.msra.mxu0 0.0
    %831 = vmatprep.subr.mxu0 0.0
    %832 = vmatpush1.msra.mxu0 0.0
    %833 = vmatprep.subr.mxu0 0.0
    %834 = vmatpush1.msra.mxu0 0.0
    %835 = vmatprep.subr.mxu0 0.0
    %836 = vmatpush1.msra.mxu0 0.0
    %837 = vmatprep.subr.mxu0 0.0
    %838 = vmatpush1.msra.mxu0 0.0
    %839 = vmatprep.subr.mxu0 0.0
    %840 = vmatpush1.msra.mxu0 0.0
    %841 = vmatprep.subr.mxu0 0.0
    %842 = vmatpush1.msra.mxu0 0.0
    %843 = vmatprep.subr.mxu0 0.0
    %844 = vmatpush1.msra.mxu0 0.0
    %845 = vmatprep.subr.mxu0 0.0
    %846 = vmatpush1.msra.mxu0 0.0
    %847 = vmatprep.subr.mxu0 0.0
    %848 = vmatpush1.msra.mxu0 0.0
    %849 = vmatprep.subr.mxu0 0.0
    %850 = vmatpush1.msra.mxu0 0.0
    %851 = vmatprep.subr.mxu0 0.0
    %852 = vmatpush1.msra.mxu0 0.0
    %853 = vmatprep.subr.mxu0 0.0
    %854 = vmatpush1.msra.mxu0 0.0
    %855 = vmatprep.subr.mxu0 0.0
    %856 = vmatpush1.msra.mxu0 0.0
    %857 = vmatprep.subr.mxu0 0.0
    %858 = vmatpush1.msra.mxu0 0.0
    %859 = vmatprep.subr.mxu0 0.0
    %860 = vmatpush1.msra.mxu0 0.0
    %861 = vmatprep.subr.mxu0 0.0
    %862 = vmatpush1.msra.mxu0 0.0
    %863 = vmatprep.subr.mxu0 0.0
    %864 = vmatpush1.msra.mxu0 0.0
    %865 = vmatprep.subr.mxu0 0.0
    %866 = vmatpush1.msra.mxu0 0.0
    %867 = vmatprep.subr.mxu0 0.0
    %868 = vmatpush1.msra.mxu0 0.0
    %869 = vmatprep.subr.mxu0 0.0
    %870 = vmatpush1.msra.mxu0 0.0
    %871 = vmatprep.mubr.f32.mxu0 0.0
    %872 = vmatmul.mubr.f32.gmra.mrb[0].mxu0 %v634
    %v873 = vpop.f32.mrb[0].mxu0
    %v874 = vadd.f32 0.0, %v873
    %v875 = vpop.f32.mrb[0].mxu0
    %876 = vmatprep.mubr.f32.mxu0 0.0
    %877 = vmatmul.mubr.f32.gmra.mrb[0].mxu0 %v637
    %v878 = vpop.f32.mrb[0].mxu0
    %v879 = vadd.f32 0.0, %v878
    %v880 = vpop.f32.mrb[0].mxu0
    %881 = vmatprep.mubr.f32.mxu0 0.0
    %882 = vmatmul.mubr.f32.gmra.mrb[0].mxu0 %v640
    %v883 = vpop.f32.mrb[0].mxu0
    %v884 = vadd.f32 0.0, %v883
    %v885 = vpop.f32.mrb[0].mxu0
    %886 = vdwg.mxu0
    %v887 = vsub.f32 %v794, %v874
    %v888 = vsub.f32 %v799, %v879
    %v889 = vsub.f32 %v804, %v884
    %v890 = vmul.f32 %v887, %v887
    %v891 = vmul.f32 %v888, %v888
    %v892 = vmul.f32 %v889, %v889
    %vm893 = vcmask 23552
    %v894 = vsel %vm893, %v890, 0.0
    %895 = vadd.xlane.f32.xlu0 %v894
    %v896 = vpop.xlane.xlu0 %895
    %v897 = vsel %vm893, %v891, 0.0
    %898 = vadd.xlane.f32.xlu0 %v897
    %v899 = vpop.xlane.xlu0 %898
    %v900 = vsel %vm893, %v892, 0.0
    %901 = vadd.xlane.f32.xlu0 %v900
    %v902 = vpop.xlane.xlu0 %901
    %v903 = vld [vmem:[%s31] sm:$0xff]
    %v904 = vld [vmem:[%s31 + $0x8] sm:$0xff]
    %v905 = vld [vmem:[%s31 + $0x10] sm:$0xff]
    %v906 = vld [vmem:[%s31 + $0x18] sm:$0xff]
    %v907 = vld [vmem:[%s33] sm:$0xff]
    %v908 = vld [vmem:[%s33 + $0x8] sm:$0xff]
    %v909 = vld [vmem:[%s33 + $0x10] sm:$0xff]
    %v910 = vld [vmem:[%s33 + $0x18] sm:$0xff]
    %v912 = vsel %vm300, %v709, 0
    %v915 = vsel %vm300, %v714, 0
    %v918 = vsel %vm300, %v719, 0
    %920 = vmatprep.subr.mxu0 0.0
    %921 = vmatpush1.msra.mxu0 %v907
    %922 = vmatprep.subr.mxu0 0.0
    %923 = vmatpush1.msra.mxu0 %v908
    %924 = vmatprep.subr.mxu0 0.0
    %925 = vmatpush1.msra.mxu0 %v909
    %926 = vmatprep.subr.mxu0 0.0
    %927 = vmatpush1.msra.mxu0 %v910
    %928 = vmatprep.subr.mxu0 0.0
    %929 = vmatpush1.msra.mxu0 0.0
    %930 = vmatprep.subr.mxu0 0.0
    %931 = vmatpush1.msra.mxu0 0.0
    %932 = vmatprep.subr.mxu0 0.0
    %933 = vmatpush1.msra.mxu0 0.0
    %934 = vmatprep.subr.mxu0 0.0
    %935 = vmatpush1.msra.mxu0 0.0
    %936 = vmatprep.subr.mxu0 0.0
    %937 = vmatpush1.msra.mxu0 0.0
    %938 = vmatprep.subr.mxu0 0.0
    %939 = vmatpush1.msra.mxu0 0.0
    %940 = vmatprep.subr.mxu0 0.0
    %941 = vmatpush1.msra.mxu0 0.0
    %942 = vmatprep.subr.mxu0 0.0
    %943 = vmatpush1.msra.mxu0 0.0
    %944 = vmatprep.subr.mxu0 0.0
    %945 = vmatpush1.msra.mxu0 0.0
    %946 = vmatprep.subr.mxu0 0.0
    %947 = vmatpush1.msra.mxu0 0.0
    %948 = vmatprep.subr.mxu0 0.0
    %949 = vmatpush1.msra.mxu0 0.0
    %950 = vmatprep.subr.mxu0 0.0
    %951 = vmatpush1.msra.mxu0 0.0
    %952 = vmatprep.subr.mxu0 0.0
    %953 = vmatpush1.msra.mxu0 0.0
    %954 = vmatprep.subr.mxu0 0.0
    %955 = vmatpush1.msra.mxu0 0.0
    %956 = vmatprep.subr.mxu0 0.0
    %957 = vmatpush1.msra.mxu0 0.0
    %958 = vmatprep.subr.mxu0 0.0
    %959 = vmatpush1.msra.mxu0 0.0
    %960 = vmatprep.subr.mxu0 0.0
    %961 = vmatpush1.msra.mxu0 0.0
    %962 = vmatprep.subr.mxu0 0.0
    %963 = vmatpush1.msra.mxu0 0.0
    %964 = vmatprep.subr.mxu0 0.0
    %965 = vmatpush1.msra.mxu0 0.0
    %966 = vmatprep.subr.mxu0 0.0
    %967 = vmatpush1.msra.mxu0 0.0
    %968 = vmatprep.subr.mxu0 0.0
    %969 = vmatpush1.msra.mxu0 0.0
    %970 = vmatprep.subr.mxu0 0.0
    %971 = vmatpush1.msra.mxu0 0.0
    %972 = vmatprep.subr.mxu0 0.0
    %973 = vmatpush1.msra.mxu0 0.0
    %974 = vmatprep.subr.mxu0 0.0
    %975 = vmatpush1.msra.mxu0 0.0
    %976 = vmatprep.subr.mxu0 0.0
    %977 = vmatpush1.msra.mxu0 0.0
    %978 = vmatprep.subr.mxu0 0.0
    %979 = vmatpush1.msra.mxu0 0.0
    %980 = vmatprep.subr.mxu0 0.0
    %981 = vmatpush1.msra.mxu0 0.0
    %982 = vmatprep.subr.mxu0 0.0
    %983 = vmatpush1.msra.mxu0 0.0
    %984 = vmatprep.mubr.f32.mxu0 0.0
    %985 = vmatmul.mubr.f32.gmra.mrb[0].mxu0 %v912
    %v986 = vpop.f32.mrb[0].mxu0
    %v987 = vadd.f32 0.0, %v986
    %v988 = vpop.f32.mrb[0].mxu0
    %989 = vmatprep.mubr.f32.mxu0 0.0
    %990 = vmatmul.mubr.f32.gmra.mrb[0].mxu0 %v915
    %v991 = vpop.f32.mrb[0].mxu0
    %v992 = vadd.f32 0.0, %v991
    %v993 = vpop.f32.mrb[0].mxu0
    %994 = vmatprep.mubr.f32.mxu0 0.0
    %995 = vmatmul.mubr.f32.gmra.mrb[0].mxu0 %v918
    %v996 = vpop.f32.mrb[0].mxu0
    %v997 = vadd.f32 0.0, %v996
    %v998 = vpop.f32.mrb[0].mxu0
    %999 = vdwg.mxu0
    %v1001 = vsel %vm300, %v620, 0
    %v1004 = vsel %vm300, %v625, 0
    %v1007 = vsel %vm300, %v630, 0
    %1009 = vmatprep.subr.mxu0 0.0
    %1010 = vmatpush1.msra.mxu0 %v903
    %1011 = vmatprep.subr.mxu0 0.0
    %1012 = vmatpush1.msra.mxu0 %v904
    %1013 = vmatprep.subr.mxu0 0.0
    %1014 = vmatpush1.msra.mxu0 %v905
    %1015 = vmatprep.subr.mxu0 0.0
    %1016 = vmatpush1.msra.mxu0 %v906
    %1017 = vmatprep.subr.mxu0 0.0
    %1018 = vmatpush1.msra.mxu0 0.0
    %1019 = vmatprep.subr.mxu0 0.0
    %1020 = vmatpush1.msra.mxu0 0.0
    %1021 = vmatprep.subr.mxu0 0.0
    %1022 = vmatpush1.msra.mxu0 0.0
    %1023 = vmatprep.subr.mxu0 0.0
    %1024 = vmatpush1.msra.mxu0 0.0
    %1025 = vmatprep.subr.mxu0 0.0
    %1026 = vmatpush1.msra.mxu0 0.0
    %1027 = vmatprep.subr.mxu0 0.0
    %1028 = vmatpush1.msra.mxu0 0.0
    %1029 = vmatprep.subr.mxu0 0.0
    %1030 = vmatpush1.msra.mxu0 0.0
    %1031 = vmatprep.subr.mxu0 0.0
    %1032 = vmatpush1.msra.mxu0 0.0
    %1033 = vmatprep.subr.mxu0 0.0
    %1034 = vmatpush1.msra.mxu0 0.0
    %1035 = vmatprep.subr.mxu0 0.0
    %1036 = vmatpush1.msra.mxu0 0.0
    %1037 = vmatprep.subr.mxu0 0.0
    %1038 = vmatpush1.msra.mxu0 0.0
    %1039 = vmatprep.subr.mxu0 0.0
    %1040 = vmatpush1.msra.mxu0 0.0
    %1041 = vmatprep.subr.mxu0 0.0
    %1042 = vmatpush1.msra.mxu0 0.0
    %1043 = vmatprep.subr.mxu0 0.0
    %1044 = vmatpush1.msra.mxu0 0.0
    %1045 = vmatprep.subr.mxu0 0.0
    %1046 = vmatpush1.msra.mxu0 0.0
    %1047 = vmatprep.subr.mxu0 0.0
    %1048 = vmatpush1.msra.mxu0 0.0
    %1049 = vmatprep.subr.mxu0 0.0
    %1050 = vmatpush1.msra.mxu0 0.0
    %1051 = vmatprep.subr.mxu0 0.0
    %1052 = vmatpush1.msra.mxu0 0.0
    %1053 = vmatprep.subr.mxu0 0.0
    %1054 = vmatpush1.msra.mxu0 0.0
    %1055 = vmatprep.subr.mxu0 0.0
    %1056 = vmatpush1.msra.mxu0 0.0
    %1057 = vmatprep.subr.mxu0 0.0
    %1058 = vmatpush1.msra.mxu0 0.0
    %1059 = vmatprep.subr.mxu0 0.0
    %1060 = vmatpush1.msra.mxu0 0.0
    %1061 = vmatprep.subr.mxu0 0.0
    %1062 = vmatpush1.msra.mxu0 0.0
    %1063 = vmatprep.subr.mxu0 0.0
    %1064 = vmatpush1.msra.mxu0 0.0
    %1065 = vmatprep.subr.mxu0 0.0
    %1066 = vmatpush1.msra.mxu0 0.0
    %1067 = vmatprep.subr.mxu0 0.0
    %1068 = vmatpush1.msra.mxu0 0.0
    %1069 = vmatprep.subr.mxu0 0.0
    %1070 = vmatpush1.msra.mxu0 0.0
    %1071 = vmatprep.subr.mxu0 0.0
    %1072 = vmatpush1.msra.mxu0 0.0
    %1073 = vmatprep.mubr.f32.mxu0 0.0
    %1074 = vmatmul.mubr.f32.gmra.mrb[0].mxu0 %v1001
    %v1075 = vpop.f32.mrb[0].mxu0
    %v1076 = vadd.f32 %v987, %v1075
    %v1077 = vpop.f32.mrb[0].mxu0
    %1078 = vmatprep.mubr.f32.mxu0 0.0
    %1079 = vmatmul.mubr.f32.gmra.mrb[0].mxu0 %v1004
    %v1080 = vpop.f32.mrb[0].mxu0
    %v1081 = vadd.f32 %v992, %v1080
    %v1082 = vpop.f32.mrb[0].mxu0
    %1083 = vmatprep.mubr.f32.mxu0 0.0
    %1084 = vmatmul.mubr.f32.gmra.mrb[0].mxu0 %v1007
    %v1085 = vpop.f32.mrb[0].mxu0
    %v1086 = vadd.f32 %v997, %v1085
    %v1087 = vpop.f32.mrb[0].mxu0
    %1088 = vdwg.mxu0
    %v1089 = vld [vmem:[%s35] sm:$0x1]
    %v1091 = vlaneseq
    %v1092 = vshrl.u32 %v1091, 7
    %v1093 = vsub.s32 0, %v1092
    %v1094 = vrot.slane %v1089, %v1093
    %v1096 = vmul.f32 %v896, %v1094
    %v1097 = vmul.f32 %v899, %v1094
    %v1098 = vmul.f32 %v902, %v1094
    %v1099 = vadd.f32 %v1076, %v1096
    %v1100 = vadd.f32 %v1081, %v1097
    %v1101 = vadd.f32 %v1086, %v1098
    %v1102 = vld [vmem:[%s3] sm:$0xff]
    %v1103 = vld [vmem:[%s3 + $0x8] sm:$0xff]
    %v1104 = vld [vmem:[%s3 + $0x10] sm:$0xff]
    %v1105 = vld [vmem:[%s37] sm:$0x7f]
    %vm1106 = vcmask 56320
    %v1108 = vsel %vm1106, %v1102, 0
    %v1111 = vsel %vm1106, %v1103, 0
    %v1114 = vsel %vm1106, %v1104, 0
    %vm1116 = vcmask 1046528
    %v1118 = vsel %vm1116, %v1105, 0
    %1120 = vmatprep.subr.mxu0 0.0
    %1121 = vmatpush1.msra.mxu0 %v1118
    %1122 = vmatprep.subr.mxu0 0.0
    %1123 = vmatpush1.msra.mxu0 0.0
    %1124 = vmatprep.subr.mxu0 0.0
    %1125 = vmatpush1.msra.mxu0 0.0
    %1126 = vmatprep.subr.mxu0 0.0
    %1127 = vmatpush1.msra.mxu0 0.0
    %1128 = vmatprep.subr.mxu0 0.0
    %1129 = vmatpush1.msra.mxu0 0.0
    %1130 = vmatprep.subr.mxu0 0.0
    %1131 = vmatpush1.msra.mxu0 0.0
    %1132 = vmatprep.subr.mxu0 0.0
    %1133 = vmatpush1.msra.mxu0 0.0
    %1134 = vmatprep.subr.mxu0 0.0
    %1135 = vmatpush1.msra.mxu0 0.0
    %1136 = vmatprep.subr.mxu0 0.0
    %1137 = vmatpush1.msra.mxu0 0.0
    %1138 = vmatprep.subr.mxu0 0.0
    %1139 = vmatpush1.msra.mxu0 0.0
    %1140 = vmatprep.subr.mxu0 0.0
    %1141 = vmatpush1.msra.mxu0 0.0
    %1142 = vmatprep.subr.mxu0 0.0
    %1143 = vmatpush1.msra.mxu0 0.0
    %1144 = vmatprep.subr.mxu0 0.0
    %1145 = vmatpush1.msra.mxu0 0.0
    %1146 = vmatprep.subr.mxu0 0.0
    %1147 = vmatpush1.msra.mxu0 0.0
    %1148 = vmatprep.subr.mxu0 0.0
    %1149 = vmatpush1.msra.mxu0 0.0
    %1150 = vmatprep.subr.mxu0 0.0
    %1151 = vmatpush1.msra.mxu0 0.0
    %1152 = vmatprep.subr.mxu0 0.0
    %1153 = vmatpush1.msra.mxu0 0.0
    %1154 = vmatprep.subr.mxu0 0.0
    %1155 = vmatpush1.msra.mxu0 0.0
    %1156 = vmatprep.subr.mxu0 0.0
    %1157 = vmatpush1.msra.mxu0 0.0
    %1158 = vmatprep.subr.mxu0 0.0
    %1159 = vmatpush1.msra.mxu0 0.0
    %1160 = vmatprep.subr.mxu0 0.0
    %1161 = vmatpush1.msra.mxu0 0.0
    %1162 = vmatprep.subr.mxu0 0.0
    %1163 = vmatpush1.msra.mxu0 0.0
    %1164 = vmatprep.subr.mxu0 0.0
    %1165 = vmatpush1.msra.mxu0 0.0
    %1166 = vmatprep.subr.mxu0 0.0
    %1167 = vmatpush1.msra.mxu0 0.0
    %1168 = vmatprep.subr.mxu0 0.0
    %1169 = vmatpush1.msra.mxu0 0.0
    %1170 = vmatprep.subr.mxu0 0.0
    %1171 = vmatpush1.msra.mxu0 0.0
    %1172 = vmatprep.subr.mxu0 0.0
    %1173 = vmatpush1.msra.mxu0 0.0
    %1174 = vmatprep.subr.mxu0 0.0
    %1175 = vmatpush1.msra.mxu0 0.0
    %1176 = vmatprep.subr.mxu0 0.0
    %1177 = vmatpush1.msra.mxu0 0.0
    %1178 = vmatprep.subr.mxu0 0.0
    %1179 = vmatpush1.msra.mxu0 0.0
    %1180 = vmatprep.subr.mxu0 0.0
    %1181 = vmatpush1.msra.mxu0 0.0
    %1182 = vmatprep.subr.mxu0 0.0
    %1183 = vmatpush1.msra.mxu0 0.0
    %1184 = vmatprep.mubr.f32.mxu0 0.0
    %1185 = vmatmul.mubr.f32.gmra.mrb[0].mxu0 %v1108
    %v1186 = vpop.f32.mrb[0].mxu0
    %v1187 = vadd.f32 0.0, %v1186
    %v1188 = vpop.f32.mrb[0].mxu0
    %1189 = vmatprep.mubr.f32.mxu0 0.0
    %1190 = vmatmul.mubr.f32.gmra.mrb[0].mxu0 %v1111
    %v1191 = vpop.f32.mrb[0].mxu0
    %v1192 = vadd.f32 0.0, %v1191
    %v1193 = vpop.f32.mrb[0].mxu0
    %1194 = vmatprep.mubr.f32.mxu0 0.0
    %1195 = vmatmul.mubr.f32.gmra.mrb[0].mxu0 %v1114
    %v1196 = vpop.f32.mrb[0].mxu0
    %v1197 = vadd.f32 0.0, %v1196
    %v1198 = vpop.f32.mrb[0].mxu0
    %1199 = vdwg.mxu0
    %v1200 = vadd.f32 %v1099, %v1187
    %v1201 = vadd.f32 %v1100, %v1192
    %v1202 = vadd.f32 %v1101, %v1197
    %v1203 = vld [vmem:[%s39] sm:$0x1]
    %v1205 = vlaneseq
    %v1206 = vshrl.u32 %v1205, 7
    %v1207 = vsub.s32 0, %v1206
    %v1208 = vrot.slane %v1203, %v1207
    %v1210 = vadd.f32 %v1200, %v1208
    %v1211 = vadd.f32 %v1201, %v1208
    %v1212 = vadd.f32 %v1202, %v1208
    %v1213 = vxor.u32 %v1210, 2147483648
    %v1214 = vxor.u32 %v1211, 2147483648
    %v1215 = vxor.u32 %v1212, 2147483648
    %v1216 = vmul.f32 %v1213, 1.442695
    %v1217 = vpow.pop %v1216
    %v1218 = vmul.f32 %v1214, 1.442695
    %v1219 = vpow.pop %v1218
    %v1220 = vmul.f32 %v1215, 1.442695
    %v1221 = vpow.pop %v1220
    %v1222 = vadd.f32 %v1217, 1.0
    %v1223 = vadd.f32 %v1219, 1.0
    %v1224 = vadd.f32 %v1221, 1.0
    %v1225 = vrcp.pop %v1222
    %v1226 = vmul.f32 1.0, %v1225
    %v1227 = vrcp.pop %v1223
    %v1228 = vmul.f32 1.0, %v1227
    %v1229 = vrcp.pop %v1224
    %v1230 = vmul.f32 1.0, %v1229
    %v1231 = vmul.f32 %v1210, %v1226
    %v1232 = vmul.f32 %v1211, %v1228
    %v1233 = vmul.f32 %v1212, %v1230
    %v1234 = vld [vmem:[%s41] sm:$0xff]
    %v1235 = vld [vmem:[%s41 + $0x8] sm:$0xff]
    %v1236 = vld [vmem:[%s41 + $0x10] sm:$0xff]
    %v1237 = vld [vmem:[%s41 + $0x18] sm:$0xff]
    %v1238 = vld [vmem:[%s43] sm:$0x1]
    %v1240 = vlaneseq
    %v1241 = vshrl.u32 %v1240, 7
    %v1242 = vsub.s32 0, %v1241
    %v1243 = vrot.slane %v1238, %v1242
    %v1246 = vsel %vm300, %v1231, 0
    %v1249 = vsel %vm300, %v1232, 0
    %v1252 = vsel %vm300, %v1233, 0
    %1254 = vmatprep.subr.mxu0 0.0
    %1255 = vmatpush1.msra.mxu0 %v1234
    %1256 = vmatprep.subr.mxu0 0.0
    %1257 = vmatpush1.msra.mxu0 %v1235
    %1258 = vmatprep.subr.mxu0 0.0
    %1259 = vmatpush1.msra.mxu0 %v1236
    %1260 = vmatprep.subr.mxu0 0.0
    %1261 = vmatpush1.msra.mxu0 %v1237
    %1262 = vmatprep.subr.mxu0 0.0
    %1263 = vmatpush1.msra.mxu0 0.0
    %1264 = vmatprep.subr.mxu0 0.0
    %1265 = vmatpush1.msra.mxu0 0.0
    %1266 = vmatprep.subr.mxu0 0.0
    %1267 = vmatpush1.msra.mxu0 0.0
    %1268 = vmatprep.subr.mxu0 0.0
    %1269 = vmatpush1.msra.mxu0 0.0
    %1270 = vmatprep.subr.mxu0 0.0
    %1271 = vmatpush1.msra.mxu0 0.0
    %1272 = vmatprep.subr.mxu0 0.0
    %1273 = vmatpush1.msra.mxu0 0.0
    %1274 = vmatprep.subr.mxu0 0.0
    %1275 = vmatpush1.msra.mxu0 0.0
    %1276 = vmatprep.subr.mxu0 0.0
    %1277 = vmatpush1.msra.mxu0 0.0
    %1278 = vmatprep.subr.mxu0 0.0
    %1279 = vmatpush1.msra.mxu0 0.0
    %1280 = vmatprep.subr.mxu0 0.0
    %1281 = vmatpush1.msra.mxu0 0.0
    %1282 = vmatprep.subr.mxu0 0.0
    %1283 = vmatpush1.msra.mxu0 0.0
    %1284 = vmatprep.subr.mxu0 0.0
    %1285 = vmatpush1.msra.mxu0 0.0
    %1286 = vmatprep.subr.mxu0 0.0
    %1287 = vmatpush1.msra.mxu0 0.0
    %1288 = vmatprep.subr.mxu0 0.0
    %1289 = vmatpush1.msra.mxu0 0.0
    %1290 = vmatprep.subr.mxu0 0.0
    %1291 = vmatpush1.msra.mxu0 0.0
    %1292 = vmatprep.subr.mxu0 0.0
    %1293 = vmatpush1.msra.mxu0 0.0
    %1294 = vmatprep.subr.mxu0 0.0
    %1295 = vmatpush1.msra.mxu0 0.0
    %1296 = vmatprep.subr.mxu0 0.0
    %1297 = vmatpush1.msra.mxu0 0.0
    %1298 = vmatprep.subr.mxu0 0.0
    %1299 = vmatpush1.msra.mxu0 0.0
    %1300 = vmatprep.subr.mxu0 0.0
    %1301 = vmatpush1.msra.mxu0 0.0
    %1302 = vmatprep.subr.mxu0 0.0
    %1303 = vmatpush1.msra.mxu0 0.0
    %1304 = vmatprep.subr.mxu0 0.0
    %1305 = vmatpush1.msra.mxu0 0.0
    %1306 = vmatprep.subr.mxu0 0.0
    %1307 = vmatpush1.msra.mxu0 0.0
    %1308 = vmatprep.subr.mxu0 0.0
    %1309 = vmatpush1.msra.mxu0 0.0
    %1310 = vmatprep.subr.mxu0 0.0
    %1311 = vmatpush1.msra.mxu0 0.0
    %1312 = vmatprep.subr.mxu0 0.0
    %1313 = vmatpush1.msra.mxu0 0.0
    %1314 = vmatprep.subr.mxu0 0.0
    %1315 = vmatpush1.msra.mxu0 0.0
    %1316 = vmatprep.subr.mxu0 0.0
    %1317 = vmatpush1.msra.mxu0 0.0
    %1318 = vmatprep.mubr.f32.mxu0 0.0
    %1319 = vmatmul.mubr.f32.gmra.mrb[0].mxu0 %v1246
    %v1320 = vpop.f32.mrb[0].mxu0
    %v1321 = vadd.f32 %v1243, %v1320
    %v1322 = vpop.f32.mrb[0].mxu0
    %1323 = vmatprep.mubr.f32.mxu0 0.0
    %1324 = vmatmul.mubr.f32.gmra.mrb[0].mxu0 %v1249
    %v1325 = vpop.f32.mrb[0].mxu0
    %v1326 = vadd.f32 %v1243, %v1325
    %v1327 = vpop.f32.mrb[0].mxu0
    %1328 = vmatprep.mubr.f32.mxu0 0.0
    %1329 = vmatmul.mubr.f32.gmra.mrb[0].mxu0 %v1252
    %v1330 = vpop.f32.mrb[0].mxu0
    %v1331 = vadd.f32 %v1243, %v1330
    %v1332 = vpop.f32.mrb[0].mxu0
    %1333 = vdwg.mxu0
    %v1334 = vxor.u32 %v1321, 2147483648
    %v1335 = vxor.u32 %v1326, 2147483648
    %v1336 = vxor.u32 %v1331, 2147483648
    %v1337 = vmul.f32 %v1334, 1.442695
    %v1338 = vpow.pop %v1337
    %v1339 = vmul.f32 %v1335, 1.442695
    %v1340 = vpow.pop %v1339
    %v1341 = vmul.f32 %v1336, 1.442695
    %v1342 = vpow.pop %v1341
    %v1343 = vadd.f32 %v1338, 1.0
    %v1344 = vadd.f32 %v1340, 1.0
    %v1345 = vadd.f32 %v1342, 1.0
    %v1346 = vrcp.pop %v1343
    %v1347 = vmul.f32 1.0, %v1346
    %v1348 = vrcp.pop %v1344
    %v1349 = vmul.f32 1.0, %v1348
    %v1350 = vrcp.pop %v1345
    %v1351 = vmul.f32 1.0, %v1350
    %v1352 = vmul.f32 %v1321, %v1347
    %v1353 = vmul.f32 %v1326, %v1349
    %v1354 = vmul.f32 %v1331, %v1351
    %v1355 = vlaneseq
    %v1356 = vshrl.u32 %v1355, 7
    %v1357 = vadd.s32 %v1356, 8
    %v1358 = vld [vmem:[#allocation4] sm:$0x1]
    %v1359 = vlaneseq
    %v1360 = vshrl.u32 %v1359, 7
    %v1361 = vsub.s32 0, %v1360
    %v1362 = vrot.slane %v1358, %v1361
    %vm1363 = vcmp.eq.s32.totalorder %v1356, %v1362
    %vm1364 = vcmp.eq.s32.totalorder %v1357, %v1362
    %v1365 = vsel %vm1363, 1.0, 0.0
    %v1366 = vsel %vm1364, 1.0, 0.0
    %vm1367 = vcmask 195584
    %v1369 = vsel %vm1367, %v1365, 0
    %v1372 = vsel %vm1367, %v1366, 0
    %1374 = vmatprep.subr.mxu0 0.0
    %1375 = vmatpush1.msra.mxu0 %v1352
    %1376 = vmatprep.subr.mxu0 0.0
    %1377 = vmatpush1.msra.mxu0 %v1353
    %1378 = vmatprep.subr.mxu0 0.0
    %1379 = vmatpush1.msra.mxu0 %v1354
    %1380 = vmatprep.subr.mxu0 0.0
    %1381 = vmatpush1.msra.mxu0 0.0
    %1382 = vmatprep.subr.mxu0 0.0
    %1383 = vmatpush1.msra.mxu0 0.0
    %1384 = vmatprep.subr.mxu0 0.0
    %1385 = vmatpush1.msra.mxu0 0.0
    %1386 = vmatprep.subr.mxu0 0.0
    %1387 = vmatpush1.msra.mxu0 0.0
    %1388 = vmatprep.subr.mxu0 0.0
    %1389 = vmatpush1.msra.mxu0 0.0
    %1390 = vmatprep.subr.mxu0 0.0
    %1391 = vmatpush1.msra.mxu0 0.0
    %1392 = vmatprep.subr.mxu0 0.0
    %1393 = vmatpush1.msra.mxu0 0.0
    %1394 = vmatprep.subr.mxu0 0.0
    %1395 = vmatpush1.msra.mxu0 0.0
    %1396 = vmatprep.subr.mxu0 0.0
    %1397 = vmatpush1.msra.mxu0 0.0
    %1398 = vmatprep.subr.mxu0 0.0
    %1399 = vmatpush1.msra.mxu0 0.0
    %1400 = vmatprep.subr.mxu0 0.0
    %1401 = vmatpush1.msra.mxu0 0.0
    %1402 = vmatprep.subr.mxu0 0.0
    %1403 = vmatpush1.msra.mxu0 0.0
    %1404 = vmatprep.subr.mxu0 0.0
    %1405 = vmatpush1.msra.mxu0 0.0
    %1406 = vmatprep.subr.mxu0 0.0
    %1407 = vmatpush1.msra.mxu0 0.0
    %1408 = vmatprep.subr.mxu0 0.0
    %1409 = vmatpush1.msra.mxu0 0.0
    %1410 = vmatprep.subr.mxu0 0.0
    %1411 = vmatpush1.msra.mxu0 0.0
    %1412 = vmatprep.subr.mxu0 0.0
    %1413 = vmatpush1.msra.mxu0 0.0
    %1414 = vmatprep.subr.mxu0 0.0
    %1415 = vmatpush1.msra.mxu0 0.0
    %1416 = vmatprep.subr.mxu0 0.0
    %1417 = vmatpush1.msra.mxu0 0.0
    %1418 = vmatprep.subr.mxu0 0.0
    %1419 = vmatpush1.msra.mxu0 0.0
    %1420 = vmatprep.subr.mxu0 0.0
    %1421 = vmatpush1.msra.mxu0 0.0
    %1422 = vmatprep.subr.mxu0 0.0
    %1423 = vmatpush1.msra.mxu0 0.0
    %1424 = vmatprep.subr.mxu0 0.0
    %1425 = vmatpush1.msra.mxu0 0.0
    %1426 = vmatprep.subr.mxu0 0.0
    %1427 = vmatpush1.msra.mxu0 0.0
    %1428 = vmatprep.subr.mxu0 0.0
    %1429 = vmatpush1.msra.mxu0 0.0
    %1430 = vmatprep.subr.mxu0 0.0
    %1431 = vmatpush1.msra.mxu0 0.0
    %1432 = vmatprep.subr.mxu0 0.0
    %1433 = vmatpush1.msra.mxu0 0.0
    %1434 = vmatprep.subr.mxu0 0.0
    %1435 = vmatpush1.msra.mxu0 0.0
    %1436 = vmatprep.subr.mxu0 0.0
    %1437 = vmatpush1.msra.mxu0 0.0
    %1438 = vmatprep.mubr.f32.mxu0 0.0
    %1439 = vmatmul.mubr.f32.gmra.mrb[0].mxu0 %v1369
    %v1440 = vpop.f32.mrb[0].mxu0
    %v1441 = vadd.f32 0.0, %v1440
    %v1442 = vpop.f32.mrb[0].mxu0
    %1443 = vmatprep.mubr.f32.mxu0 0.0
    %1444 = vmatmul.mubr.f32.gmra.mrb[0].mxu0 %v1372
    %v1445 = vpop.f32.mrb[0].mxu0
    %v1446 = vadd.f32 0.0, %v1445
    %v1447 = vpop.f32.mrb[0].mxu0
    %1448 = vdwg.mxu0
    %v1449 = vld [vmem:[%s45] sm:$0xff]
    %v1450 = vld [vmem:[%s45 + $0x8] sm:$0xff]
    %v1451 = vld [vmem:[%s45 + $0x10] sm:$0xff]
    %v1452 = vld [vmem:[%s45 + $0x18] sm:$0xff]
    %v1453 = vld [vmem:[%s47] sm:$0xff]
    %v1454 = vld [vmem:[%s47 + $0x8] sm:$0xff]
    %v1455 = vld [vmem:[%s47 + $0x10] sm:$0xff]
    %v1456 = vld [vmem:[%s47 + $0x18] sm:$0xff]
    %v1458 = vsel %vm300, %v1441, 0
    %v1461 = vsel %vm300, %v1446, 0
    %1463 = vmatprep.subr.mxu0 0.0
    %1464 = vmatpush1.msra.mxu0 %v1453
    %1465 = vmatprep.subr.mxu0 0.0
    %1466 = vmatpush1.msra.mxu0 %v1454
    %1467 = vmatprep.subr.mxu0 0.0
    %1468 = vmatpush1.msra.mxu0 %v1455
    %1469 = vmatprep.subr.mxu0 0.0
    %1470 = vmatpush1.msra.mxu0 %v1456
    %1471 = vmatprep.subr.mxu0 0.0
    %1472 = vmatpush1.msra.mxu0 0.0
    %1473 = vmatprep.subr.mxu0 0.0
    %1474 = vmatpush1.msra.mxu0 0.0
    %1475 = vmatprep.subr.mxu0 0.0
    %1476 = vmatpush1.msra.mxu0 0.0
    %1477 = vmatprep.subr.mxu0 0.0
    %1478 = vmatpush1.msra.mxu0 0.0
    %1479 = vmatprep.subr.mxu0 0.0
    %1480 = vmatpush1.msra.mxu0 0.0
    %1481 = vmatprep.subr.mxu0 0.0
    %1482 = vmatpush1.msra.mxu0 0.0
    %1483 = vmatprep.subr.mxu0 0.0
    %1484 = vmatpush1.msra.mxu0 0.0
    %1485 = vmatprep.subr.mxu0 0.0
    %1486 = vmatpush1.msra.mxu0 0.0
    %1487 = vmatprep.subr.mxu0 0.0
    %1488 = vmatpush1.msra.mxu0 0.0
    %1489 = vmatprep.subr.mxu0 0.0
    %1490 = vmatpush1.msra.mxu0 0.0
    %1491 = vmatprep.subr.mxu0 0.0
    %1492 = vmatpush1.msra.mxu0 0.0
    %1493 = vmatprep.subr.mxu0 0.0
    %1494 = vmatpush1.msra.mxu0 0.0
    %1495 = vmatprep.subr.mxu0 0.0
    %1496 = vmatpush1.msra.mxu0 0.0
    %1497 = vmatprep.subr.mxu0 0.0
    %1498 = vmatpush1.msra.mxu0 0.0
    %1499 = vmatprep.subr.mxu0 0.0
    %1500 = vmatpush1.msra.mxu0 0.0
    %1501 = vmatprep.subr.mxu0 0.0
    %1502 = vmatpush1.msra.mxu0 0.0
    %1503 = vmatprep.subr.mxu0 0.0
    %1504 = vmatpush1.msra.mxu0 0.0
    %1505 = vmatprep.subr.mxu0 0.0
    %1506 = vmatpush1.msra.mxu0 0.0
    %1507 = vmatprep.subr.mxu0 0.0
    %1508 = vmatpush1.msra.mxu0 0.0
    %1509 = vmatprep.subr.mxu0 0.0
    %1510 = vmatpush1.msra.mxu0 0.0
    %1511 = vmatprep.subr.mxu0 0.0
    %1512 = vmatpush1.msra.mxu0 0.0
    %1513 = vmatprep.subr.mxu0 0.0
    %1514 = vmatpush1.msra.mxu0 0.0
    %1515 = vmatprep.subr.mxu0 0.0
    %1516 = vmatpush1.msra.mxu0 0.0
    %1517 = vmatprep.subr.mxu0 0.0
    %1518 = vmatpush1.msra.mxu0 0.0
    %1519 = vmatprep.subr.mxu0 0.0
    %1520 = vmatpush1.msra.mxu0 0.0
    %1521 = vmatprep.subr.mxu0 0.0
    %1522 = vmatpush1.msra.mxu0 0.0
    %1523 = vmatprep.subr.mxu0 0.0
    %1524 = vmatpush1.msra.mxu0 0.0
    %1525 = vmatprep.subr.mxu0 0.0
    %1526 = vmatpush1.msra.mxu0 0.0
    %1527 = vmatprep.mubr.f32.mxu0 0.0
    %1528 = vmatmul.mubr.f32.gmra.mrb[0].mxu0 %v1458
    %v1529 = vpop.f32.mrb[0].mxu0
    %v1530 = vadd.f32 0.0, %v1529
    %v1531 = vpop.f32.mrb[0].mxu0
    %1532 = vmatprep.mubr.f32.mxu0 0.0
    %1533 = vmatmul.mubr.f32.gmra.mrb[0].mxu0 %v1461
    %v1534 = vpop.f32.mrb[0].mxu0
    %v1535 = vadd.f32 0.0, %v1534
    %v1536 = vpop.f32.mrb[0].mxu0
    %1537 = vdwg.mxu0
    %v1539 = vsel %vm300, %v499, 0
    %v1541 = vsel %vm300, %v500, 0
    %1543 = vmatprep.subr.mxu0 0.0
    %1544 = vmatpush1.msra.mxu0 %v1449
    %1545 = vmatprep.subr.mxu0 0.0
    %1546 = vmatpush1.msra.mxu0 %v1450
    %1547 = vmatprep.subr.mxu0 0.0
    %1548 = vmatpush1.msra.mxu0 %v1451
    %1549 = vmatprep.subr.mxu0 0.0
    %1550 = vmatpush1.msra.mxu0 %v1452
    %1551 = vmatprep.subr.mxu0 0.0
    %1552 = vmatpush1.msra.mxu0 0.0
    %1553 = vmatprep.subr.mxu0 0.0
    %1554 = vmatpush1.msra.mxu0 0.0
    %1555 = vmatprep.subr.mxu0 0.0
    %1556 = vmatpush1.msra.mxu0 0.0
    %1557 = vmatprep.subr.mxu0 0.0
    %1558 = vmatpush1.msra.mxu0 0.0
    %1559 = vmatprep.subr.mxu0 0.0
    %1560 = vmatpush1.msra.mxu0 0.0
    %1561 = vmatprep.subr.mxu0 0.0
    %1562 = vmatpush1.msra.mxu0 0.0
    %1563 = vmatprep.subr.mxu0 0.0
    %1564 = vmatpush1.msra.mxu0 0.0
    %1565 = vmatprep.subr.mxu0 0.0
    %1566 = vmatpush1.msra.mxu0 0.0
    %1567 = vmatprep.subr.mxu0 0.0
    %1568 = vmatpush1.msra.mxu0 0.0
    %1569 = vmatprep.subr.mxu0 0.0
    %1570 = vmatpush1.msra.mxu0 0.0
    %1571 = vmatprep.subr.mxu0 0.0
    %1572 = vmatpush1.msra.mxu0 0.0
    %1573 = vmatprep.subr.mxu0 0.0
    %1574 = vmatpush1.msra.mxu0 0.0
    %1575 = vmatprep.subr.mxu0 0.0
    %1576 = vmatpush1.msra.mxu0 0.0
    %1577 = vmatprep.subr.mxu0 0.0
    %1578 = vmatpush1.msra.mxu0 0.0
    %1579 = vmatprep.subr.mxu0 0.0
    %1580 = vmatpush1.msra.mxu0 0.0
    %1581 = vmatprep.subr.mxu0 0.0
    %1582 = vmatpush1.msra.mxu0 0.0
    %1583 = vmatprep.subr.mxu0 0.0
    %1584 = vmatpush1.msra.mxu0 0.0
    %1585 = vmatprep.subr.mxu0 0.0
    %1586 = vmatpush1.msra.mxu0 0.0
    %1587 = vmatprep.subr.mxu0 0.0
    %1588 = vmatpush1.msra.mxu0 0.0
    %1589 = vmatprep.subr.mxu0 0.0
    %1590 = vmatpush1.msra.mxu0 0.0
    %1591 = vmatprep.subr.mxu0 0.0
    %1592 = vmatpush1.msra.mxu0 0.0
    %1593 = vmatprep.subr.mxu0 0.0
    %1594 = vmatpush1.msra.mxu0 0.0
    %1595 = vmatprep.subr.mxu0 0.0
    %1596 = vmatpush1.msra.mxu0 0.0
    %1597 = vmatprep.subr.mxu0 0.0
    %1598 = vmatpush1.msra.mxu0 0.0
    %1599 = vmatprep.subr.mxu0 0.0
    %1600 = vmatpush1.msra.mxu0 0.0
    %1601 = vmatprep.subr.mxu0 0.0
    %1602 = vmatpush1.msra.mxu0 0.0
    %1603 = vmatprep.subr.mxu0 0.0
    %1604 = vmatpush1.msra.mxu0 0.0
    %1605 = vmatprep.subr.mxu0 0.0
    %1606 = vmatpush1.msra.mxu0 0.0
    %1607 = vmatprep.mubr.f32.mxu0 0.0
    %1608 = vmatmul.mubr.f32.gmra.mrb[0].mxu0 %v1539
    %v1609 = vpop.f32.mrb[0].mxu0
    %v1610 = vadd.f32 %v1530, %v1609
    %v1611 = vpop.f32.mrb[0].mxu0
    %1612 = vmatprep.mubr.f32.mxu0 0.0
    %1613 = vmatmul.mubr.f32.gmra.mrb[0].mxu0 %v1541
    %v1614 = vpop.f32.mrb[0].mxu0
    %v1615 = vadd.f32 %v1535, %v1614
    %v1616 = vpop.f32.mrb[0].mxu0
    %1617 = vdwg.mxu0
    %v1618 = vld [vmem:[%s49] sm:$0x1]
    %v1620 = vlaneseq
    %v1621 = vshrl.u32 %v1620, 7
    %v1622 = vsub.s32 0, %v1621
    %v1623 = vrot.slane %v1618, %v1622
    %v1625 = vadd.f32 %v1610, %v1623
    %v1626 = vadd.f32 %v1615, %v1623
    %v1627 = vxor.u32 %v1625, 2147483648
    %v1628 = vxor.u32 %v1626, 2147483648
    %v1629 = vmul.f32 %v1627, 1.442695
    %v1630 = vpow.pop %v1629
    %v1631 = vmul.f32 %v1628, 1.442695
    %v1632 = vpow.pop %v1631
    %v1633 = vadd.f32 %v1630, 1.0
    %v1634 = vadd.f32 %v1632, 1.0
    %v1635 = vrcp.pop %v1633
    %v1636 = vmul.f32 1.0, %v1635
    %v1637 = vrcp.pop %v1634
    %v1638 = vmul.f32 1.0, %v1637
    %v1639 = vmul.f32 %v1625, %v1636
    %v1640 = vmul.f32 %v1626, %v1638
    %v1641 = vld [vmem:[%s51] sm:$0xff]
    %v1642 = vld [vmem:[%s51 + $0x8] sm:$0xff]
    %v1643 = vld [vmem:[%s51 + $0x10] sm:$0xff]
    %v1644 = vld [vmem:[%s51 + $0x18] sm:$0xff]
    %v1645 = vld [vmem:[%s53] sm:$0x1]
    %v1647 = vlaneseq
    %v1648 = vshrl.u32 %v1647, 7
    %v1649 = vsub.s32 0, %v1648
    %v1650 = vrot.slane %v1645, %v1649
    %v1653 = vsel %vm300, %v1639, 0
    %v1656 = vsel %vm300, %v1640, 0
    %1658 = vmatprep.subr.mxu0 0.0
    %1659 = vmatpush1.msra.mxu0 %v1641
    %1660 = vmatprep.subr.mxu0 0.0
    %1661 = vmatpush1.msra.mxu0 %v1642
    %1662 = vmatprep.subr.mxu0 0.0
    %1663 = vmatpush1.msra.mxu0 %v1643
    %1664 = vmatprep.subr.mxu0 0.0
    %1665 = vmatpush1.msra.mxu0 %v1644
    %1666 = vmatprep.subr.mxu0 0.0
    %1667 = vmatpush1.msra.mxu0 0.0
    %1668 = vmatprep.subr.mxu0 0.0
    %1669 = vmatpush1.msra.mxu0 0.0
    %1670 = vmatprep.subr.mxu0 0.0
    %1671 = vmatpush1.msra.mxu0 0.0
    %1672 = vmatprep.subr.mxu0 0.0
    %1673 = vmatpush1.msra.mxu0 0.0
    %1674 = vmatprep.subr.mxu0 0.0
    %1675 = vmatpush1.msra.mxu0 0.0
    %1676 = vmatprep.subr.mxu0 0.0
    %1677 = vmatpush1.msra.mxu0 0.0
    %1678 = vmatprep.subr.mxu0 0.0
    %1679 = vmatpush1.msra.mxu0 0.0
    %1680 = vmatprep.subr.mxu0 0.0
    %1681 = vmatpush1.msra.mxu0 0.0
    %1682 = vmatprep.subr.mxu0 0.0
    %1683 = vmatpush1.msra.mxu0 0.0
    %1684 = vmatprep.subr.mxu0 0.0
    %1685 = vmatpush1.msra.mxu0 0.0
    %1686 = vmatprep.subr.mxu0 0.0
    %1687 = vmatpush1.msra.mxu0 0.0
    %1688 = vmatprep.subr.mxu0 0.0
    %1689 = vmatpush1.msra.mxu0 0.0
    %1690 = vmatprep.subr.mxu0 0.0
    %1691 = vmatpush1.msra.mxu0 0.0
    %1692 = vmatprep.subr.mxu0 0.0
    %1693 = vmatpush1.msra.mxu0 0.0
    %1694 = vmatprep.subr.mxu0 0.0
    %1695 = vmatpush1.msra.mxu0 0.0
    %1696 = vmatprep.subr.mxu0 0.0
    %1697 = vmatpush1.msra.mxu0 0.0
    %1698 = vmatprep.subr.mxu0 0.0
    %1699 = vmatpush1.msra.mxu0 0.0
    %1700 = vmatprep.subr.mxu0 0.0
    %1701 = vmatpush1.msra.mxu0 0.0
    %1702 = vmatprep.subr.mxu0 0.0
    %1703 = vmatpush1.msra.mxu0 0.0
    %1704 = vmatprep.subr.mxu0 0.0
    %1705 = vmatpush1.msra.mxu0 0.0
    %1706 = vmatprep.subr.mxu0 0.0
    %1707 = vmatpush1.msra.mxu0 0.0
    %1708 = vmatprep.subr.mxu0 0.0
    %1709 = vmatpush1.msra.mxu0 0.0
    %1710 = vmatprep.subr.mxu0 0.0
    %1711 = vmatpush1.msra.mxu0 0.0
    %1712 = vmatprep.subr.mxu0 0.0
    %1713 = vmatpush1.msra.mxu0 0.0
    %1714 = vmatprep.subr.mxu0 0.0
    %1715 = vmatpush1.msra.mxu0 0.0
    %1716 = vmatprep.subr.mxu0 0.0
    %1717 = vmatpush1.msra.mxu0 0.0
    %1718 = vmatprep.subr.mxu0 0.0
    %1719 = vmatpush1.msra.mxu0 0.0
    %1720 = vmatprep.subr.mxu0 0.0
    %1721 = vmatpush1.msra.mxu0 0.0
    %1722 = vmatprep.mubr.f32.mxu0 0.0
    %1723 = vmatmul.mubr.f32.gmra.mrb[0].mxu0 %v1653
    %v1724 = vpop.f32.mrb[0].mxu0
    %v1725 = vadd.f32 %v1650, %v1724
    %v1726 = vpop.f32.mrb[0].mxu0
    %1727 = vmatprep.mubr.f32.mxu0 0.0
    %1728 = vmatmul.mubr.f32.gmra.mrb[0].mxu0 %v1656
    %v1729 = vpop.f32.mrb[0].mxu0
    %v1730 = vadd.f32 %v1650, %v1729
    %v1731 = vpop.f32.mrb[0].mxu0
    %1732 = vdwg.mxu0
    %v1733 = vld [vmem:[%s55] sm:$0xff]
    %v1734 = vld [vmem:[%s55 + $0x8] sm:$0xff]
    %v1735 = vld [vmem:[%s55 + $0x10] sm:$0xff]
    %v1736 = vld [vmem:[%s55 + $0x18] sm:$0xff]
    %v1737 = vld [vmem:[%s57] sm:$0x1]
    %v1739 = vlaneseq
    %v1740 = vshrl.u32 %v1739, 7
    %v1741 = vsub.s32 0, %v1740
    %v1742 = vrot.slane %v1737, %v1741
    %v1745 = vsel %vm300, %v1725, 0
    %v1748 = vsel %vm300, %v1730, 0
    %1750 = vmatprep.subr.mxu0 0.0
    %1751 = vmatpush1.msra.mxu0 %v1733
    %1752 = vmatprep.subr.mxu0 0.0
    %1753 = vmatpush1.msra.mxu0 %v1734
    %1754 = vmatprep.subr.mxu0 0.0
    %1755 = vmatpush1.msra.mxu0 %v1735
    %1756 = vmatprep.subr.mxu0 0.0
    %1757 = vmatpush1.msra.mxu0 %v1736
    %1758 = vmatprep.subr.mxu0 0.0
    %1759 = vmatpush1.msra.mxu0 0.0
    %1760 = vmatprep.subr.mxu0 0.0
    %1761 = vmatpush1.msra.mxu0 0.0
    %1762 = vmatprep.subr.mxu0 0.0
    %1763 = vmatpush1.msra.mxu0 0.0
    %1764 = vmatprep.subr.mxu0 0.0
    %1765 = vmatpush1.msra.mxu0 0.0
    %1766 = vmatprep.subr.mxu0 0.0
    %1767 = vmatpush1.msra.mxu0 0.0
    %1768 = vmatprep.subr.mxu0 0.0
    %1769 = vmatpush1.msra.mxu0 0.0
    %1770 = vmatprep.subr.mxu0 0.0
    %1771 = vmatpush1.msra.mxu0 0.0
    %1772 = vmatprep.subr.mxu0 0.0
    %1773 = vmatpush1.msra.mxu0 0.0
    %1774 = vmatprep.subr.mxu0 0.0
    %1775 = vmatpush1.msra.mxu0 0.0
    %1776 = vmatprep.subr.mxu0 0.0
    %1777 = vmatpush1.msra.mxu0 0.0
    %1778 = vmatprep.subr.mxu0 0.0
    %1779 = vmatpush1.msra.mxu0 0.0
    %1780 = vmatprep.subr.mxu0 0.0
    %1781 = vmatpush1.msra.mxu0 0.0
    %1782 = vmatprep.subr.mxu0 0.0
    %1783 = vmatpush1.msra.mxu0 0.0
    %1784 = vmatprep.subr.mxu0 0.0
    %1785 = vmatpush1.msra.mxu0 0.0
    %1786 = vmatprep.subr.mxu0 0.0
    %1787 = vmatpush1.msra.mxu0 0.0
    %1788 = vmatprep.subr.mxu0 0.0
    %1789 = vmatpush1.msra.mxu0 0.0
    %1790 = vmatprep.subr.mxu0 0.0
    %1791 = vmatpush1.msra.mxu0 0.0
    %1792 = vmatprep.subr.mxu0 0.0
    %1793 = vmatpush1.msra.mxu0 0.0
    %1794 = vmatprep.subr.mxu0 0.0
    %1795 = vmatpush1.msra.mxu0 0.0
    %1796 = vmatprep.subr.mxu0 0.0
    %1797 = vmatpush1.msra.mxu0 0.0
    %1798 = vmatprep.subr.mxu0 0.0
    %1799 = vmatpush1.msra.mxu0 0.0
    %1800 = vmatprep.subr.mxu0 0.0
    %1801 = vmatpush1.msra.mxu0 0.0
    %1802 = vmatprep.subr.mxu0 0.0
    %1803 = vmatpush1.msra.mxu0 0.0
    %1804 = vmatprep.subr.mxu0 0.0
    %1805 = vmatpush1.msra.mxu0 0.0
    %1806 = vmatprep.subr.mxu0 0.0
    %1807 = vmatpush1.msra.mxu0 0.0
    %1808 = vmatprep.subr.mxu0 0.0
    %1809 = vmatpush1.msra.mxu0 0.0
    %1810 = vmatprep.subr.mxu0 0.0
    %1811 = vmatpush1.msra.mxu0 0.0
    %1812 = vmatprep.subr.mxu0 0.0
    %1813 = vmatpush1.msra.mxu0 0.0
    %1814 = vmatprep.mubr.f32.mxu0 0.0
    %1815 = vmatmul.mubr.f32.gmra.mrb[0].mxu0 %v1745
    %v1816 = vpop.f32.mrb[0].mxu0
    %v1817 = vadd.f32 %v1742, %v1816
    %v1818 = vpop.f32.mrb[0].mxu0
    %1819 = vmatprep.mubr.f32.mxu0 0.0
    %1820 = vmatmul.mubr.f32.gmra.mrb[0].mxu0 %v1748
    %v1821 = vpop.f32.mrb[0].mxu0
    %v1822 = vadd.f32 %v1742, %v1821
    %v1823 = vpop.f32.mrb[0].mxu0
    %1824 = vdwg.mxu0
    %v1825 = vld [vmem:[%s59] sm:$0xff]
    %v1826 = vld [vmem:[%s59 + $0x8] sm:$0xff]
    %v1827 = vld [vmem:[%s59 + $0x10] sm:$0xff]
    %v1828 = vld [vmem:[%s59 + $0x18] sm:$0xff]
    %v1829 = vld [vmem:[%s61] sm:$0x1]
    %v1831 = vlaneseq
    %v1832 = vshrl.u32 %v1831, 7
    %v1833 = vsub.s32 0, %v1832
    %v1834 = vrot.slane %v1829, %v1833
    %1836 = vmatprep.subr.mxu0 0.0
    %1837 = vmatpush1.msra.mxu0 %v1825
    %1838 = vmatprep.subr.mxu0 0.0
    %1839 = vmatpush1.msra.mxu0 %v1826
    %1840 = vmatprep.subr.mxu0 0.0
    %1841 = vmatpush1.msra.mxu0 %v1827
    %1842 = vmatprep.subr.mxu0 0.0
    %1843 = vmatpush1.msra.mxu0 %v1828
    %1844 = vmatprep.subr.mxu0 0.0
    %1845 = vmatpush1.msra.mxu0 0.0
    %1846 = vmatprep.subr.mxu0 0.0
    %1847 = vmatpush1.msra.mxu0 0.0
    %1848 = vmatprep.subr.mxu0 0.0
    %1849 = vmatpush1.msra.mxu0 0.0
    %1850 = vmatprep.subr.mxu0 0.0
    %1851 = vmatpush1.msra.mxu0 0.0
    %1852 = vmatprep.subr.mxu0 0.0
    %1853 = vmatpush1.msra.mxu0 0.0
    %1854 = vmatprep.subr.mxu0 0.0
    %1855 = vmatpush1.msra.mxu0 0.0
    %1856 = vmatprep.subr.mxu0 0.0
    %1857 = vmatpush1.msra.mxu0 0.0
    %1858 = vmatprep.subr.mxu0 0.0
    %1859 = vmatpush1.msra.mxu0 0.0
    %1860 = vmatprep.subr.mxu0 0.0
    %1861 = vmatpush1.msra.mxu0 0.0
    %1862 = vmatprep.subr.mxu0 0.0
    %1863 = vmatpush1.msra.mxu0 0.0
    %1864 = vmatprep.subr.mxu0 0.0
    %1865 = vmatpush1.msra.mxu0 0.0
    %1866 = vmatprep.subr.mxu0 0.0
    %1867 = vmatpush1.msra.mxu0 0.0
    %1868 = vmatprep.subr.mxu0 0.0
    %1869 = vmatpush1.msra.mxu0 0.0
    %1870 = vmatprep.subr.mxu0 0.0
    %1871 = vmatpush1.msra.mxu0 0.0
    %1872 = vmatprep.subr.mxu0 0.0
    %1873 = vmatpush1.msra.mxu0 0.0
    %1874 = vmatprep.subr.mxu0 0.0
    %1875 = vmatpush1.msra.mxu0 0.0
    %1876 = vmatprep.subr.mxu0 0.0
    %1877 = vmatpush1.msra.mxu0 0.0
    %1878 = vmatprep.subr.mxu0 0.0
    %1879 = vmatpush1.msra.mxu0 0.0
    %1880 = vmatprep.subr.mxu0 0.0
    %1881 = vmatpush1.msra.mxu0 0.0
    %1882 = vmatprep.subr.mxu0 0.0
    %1883 = vmatpush1.msra.mxu0 0.0
    %1884 = vmatprep.subr.mxu0 0.0
    %1885 = vmatpush1.msra.mxu0 0.0
    %1886 = vmatprep.subr.mxu0 0.0
    %1887 = vmatpush1.msra.mxu0 0.0
    %1888 = vmatprep.subr.mxu0 0.0
    %1889 = vmatpush1.msra.mxu0 0.0
    %1890 = vmatprep.subr.mxu0 0.0
    %1891 = vmatpush1.msra.mxu0 0.0
    %1892 = vmatprep.subr.mxu0 0.0
    %1893 = vmatpush1.msra.mxu0 0.0
    %1894 = vmatprep.subr.mxu0 0.0
    %1895 = vmatpush1.msra.mxu0 0.0
    %1896 = vmatprep.subr.mxu0 0.0
    %1897 = vmatpush1.msra.mxu0 0.0
    %1898 = vmatprep.subr.mxu0 0.0
    %1899 = vmatpush1.msra.mxu0 0.0
    %1900 = vmatprep.mubr.f32.mxu0 0.0
    %1901 = vmatmul.mubr.f32.gmra.mrb[0].mxu0 %v1745
    %v1902 = vpop.f32.mrb[0].mxu0
    %v1903 = vadd.f32 %v1834, %v1902
    %v1904 = vpop.f32.mrb[0].mxu0
    %1905 = vmatprep.mubr.f32.mxu0 0.0
    %1906 = vmatmul.mubr.f32.gmra.mrb[0].mxu0 %v1748
    %v1907 = vpop.f32.mrb[0].mxu0
    %v1908 = vadd.f32 %v1834, %v1907
    %v1909 = vpop.f32.mrb[0].mxu0
    %1910 = vdwg.mxu0
    %v1911 = vld [vmem:[%s13] sm:$0xff]
    %v1912 = vld [vmem:[%s13 + $0x8] sm:$0xf]
    %v1913 = vmul.f32 %v1903, 1.442695
    %v1914 = vpow.pop %v1913
    %v1915 = vmul.f32 %v1908, 1.442695
    %v1916 = vpow.pop %v1915
    %v1917 = vmul.f32 %v1911, %v1914
    %v1918 = vmul.f32 %v1912, %v1916
    %v1919 = vadd.f32 %v1917, %v1817
    %v1920 = vadd.f32 %v1918, %v1822
    %vm1921 = vcmask 64512
    %1922 = vst.msk [vmem:[%s69] sm:$0xff] %vm1921, %v1817
    %vm1923 = vcmask 60416
    %1924 = vst.msk [vmem:[%s69 + $0x8] sm:$0xf] %vm1923, %v1822
    %1925 = vst.msk [vmem:[%s71] sm:$0xff] %vm1921, %v1903
    %1926 = vst.msk [vmem:[%s71 + $0x8] sm:$0xf] %vm1923, %v1908
    %1927 = vst.msk [vmem:[%s67] sm:$0xff] %vm1921, %v1919
    %1928 = vst.msk [vmem:[%s67 + $0x8] sm:$0xf] %vm1923, %v1920
    %v1929 = vld [vmem:[%s63] sm:$0xff]
    %v1930 = vld [vmem:[%s65] sm:$0x1]
    %v1932 = vlaneseq
    %v1933 = vshrl.u32 %v1932, 7
    %v1934 = vsub.s32 0, %v1933
    %v1935 = vrot.slane %v1930, %v1934
    %v1938 = vsel %vm1921, %v1919, 0
    %v1941 = vsel %vm1921, %v1920, 0
    %1943 = vmatprep.subr.mxu0 0.0
    %1944 = vmatpush1.msra.mxu0 %v1929
    %1945 = vmatprep.subr.mxu0 0.0
    %1946 = vmatpush1.msra.mxu0 0.0
    %1947 = vmatprep.subr.mxu0 0.0
    %1948 = vmatpush1.msra.mxu0 0.0
    %1949 = vmatprep.subr.mxu0 0.0
    %1950 = vmatpush1.msra.mxu0 0.0
    %1951 = vmatprep.subr.mxu0 0.0
    %1952 = vmatpush1.msra.mxu0 0.0
    %1953 = vmatprep.subr.mxu0 0.0
    %1954 = vmatpush1.msra.mxu0 0.0
    %1955 = vmatprep.subr.mxu0 0.0
    %1956 = vmatpush1.msra.mxu0 0.0
    %1957 = vmatprep.subr.mxu0 0.0
    %1958 = vmatpush1.msra.mxu0 0.0
    %1959 = vmatprep.subr.mxu0 0.0
    %1960 = vmatpush1.msra.mxu0 0.0
    %1961 = vmatprep.subr.mxu0 0.0
    %1962 = vmatpush1.msra.mxu0 0.0
    %1963 = vmatprep.subr.mxu0 0.0
    %1964 = vmatpush1.msra.mxu0 0.0
    %1965 = vmatprep.subr.mxu0 0.0
    %1966 = vmatpush1.msra.mxu0 0.0
    %1967 = vmatprep.subr.mxu0 0.0
    %1968 = vmatpush1.msra.mxu0 0.0
    %1969 = vmatprep.subr.mxu0 0.0
    %1970 = vmatpush1.msra.mxu0 0.0
    %1971 = vmatprep.subr.mxu0 0.0
    %1972 = vmatpush1.msra.mxu0 0.0
    %1973 = vmatprep.subr.mxu0 0.0
    %1974 = vmatpush1.msra.mxu0 0.0
    %1975 = vmatprep.subr.mxu0 0.0
    %1976 = vmatpush1.msra.mxu0 0.0
    %1977 = vmatprep.subr.mxu0 0.0
    %1978 = vmatpush1.msra.mxu0 0.0
    %1979 = vmatprep.subr.mxu0 0.0
    %1980 = vmatpush1.msra.mxu0 0.0
    %1981 = vmatprep.subr.mxu0 0.0
    %1982 = vmatpush1.msra.mxu0 0.0
    %1983 = vmatprep.subr.mxu0 0.0
    %1984 = vmatpush1.msra.mxu0 0.0
    %1985 = vmatprep.subr.mxu0 0.0
    %1986 = vmatpush1.msra.mxu0 0.0
    %1987 = vmatprep.subr.mxu0 0.0
    %1988 = vmatpush1.msra.mxu0 0.0
    %1989 = vmatprep.subr.mxu0 0.0
    %1990 = vmatpush1.msra.mxu0 0.0
    %1991 = vmatprep.subr.mxu0 0.0
    %1992 = vmatpush1.msra.mxu0 0.0
    %1993 = vmatprep.subr.mxu0 0.0
    %1994 = vmatpush1.msra.mxu0 0.0
    %1995 = vmatprep.subr.mxu0 0.0
    %1996 = vmatpush1.msra.mxu0 0.0
    %1997 = vmatprep.subr.mxu0 0.0
    %1998 = vmatpush1.msra.mxu0 0.0
    %1999 = vmatprep.subr.mxu0 0.0
    %2000 = vmatpush1.msra.mxu0 0.0
    %2001 = vmatprep.subr.mxu0 0.0
    %2002 = vmatpush1.msra.mxu0 0.0
    %2003 = vmatprep.subr.mxu0 0.0
    %2004 = vmatpush1.msra.mxu0 0.0
    %2005 = vmatprep.subr.mxu0 0.0
    %2006 = vmatpush1.msra.mxu0 0.0
    %2007 = vmatprep.mubr.f32.mxu0 0.0
    %2008 = vmatmul.mubr.f32.gmra.mrb[0].mxu0 %v1938
    %v2009 = vpop.f32.mrb[0].mxu0
    %v2010 = vadd.f32 %v1935, %v2009
    %v2011 = vpop.f32.mrb[0].mxu0
    %2012 = vmatprep.mubr.f32.mxu0 0.0
    %2013 = vmatmul.mubr.f32.gmra.mrb[0].mxu0 %v1941
    %v2014 = vpop.f32.mrb[0].mxu0
    %v2015 = vadd.f32 %v1935, %v2014
    %v2016 = vpop.f32.mrb[0].mxu0
    %2017 = vdwg.mxu0
    %v2018 = vmax.f32 %v2010, 0.0
    %v2019 = vmax.f32 %v2015, 0.0
    %vm2020 = vcmask 31744
    %2021 = vst.msk [vmem:[%s73] sm:$0xff] %vm2020, %v2018
    %vm2022 = vcmask 27648
    %2023 = vst.msk [vmem:[%s73 + $0x8] sm:$0xf] %vm2022, %v2019
    // Predicated region
    $region154: #{tpu_custom_call.1} parent=1 // pred_check
      _
    $region155: #{tpu_custom_call.1} parent=1 // pred_check_branch
      %2025 = sbr.rel (0) target = $region157
    $region156: #{tpu_custom_call.1} parent=1 // pred_region
      _
    $region157: #{tpu_custom_call.1} parent=1 // pred_fallthru
      _
    // Predicated region
    $region158: #{tpu_custom_call.1} parent=1 // pred_check
      _
    $region159: #{tpu_custom_call.1} parent=1 // pred_check_branch
      %2027 = sbr.rel (0) target = $region161
    $region160: #{tpu_custom_call.1} parent=1 // pred_region
      _
    $region161: #{tpu_custom_call.1} parent=1 // pred_fallthru
      _
    // Predicated region
    $region162: #{tpu_custom_call.1} parent=1 // pred_check
      _
    $region163: #{tpu_custom_call.1} parent=1 // pred_check_branch
      %2029 = sbr.rel (0) target = $region165
    $region164: #{tpu_custom_call.1} parent=1 // pred_region
      _
    $region165: #{tpu_custom_call.1} parent=1 // pred_fallthru
      _
    // Predicated region
    $region166: #{tpu_custom_call.1} parent=1 // pred_check
      _
    $region167: #{tpu_custom_call.1} parent=1 // pred_check_branch
      %2031 = sbr.rel (0) target = $region169
    $region168: #{tpu_custom_call.1} parent=1 // pred_region
      _
    $region169: #{tpu_custom_call.1} parent=1 // pred_fallthru
      _
    // Predicated region
    $region170: #{tpu_custom_call.1} parent=1 // pred_check
      _
    $region171: #{tpu_custom_call.1} parent=1 // pred_check_branch
      %2033 = sbr.rel (0) target = $region173
    $region172: #{tpu_custom_call.1} parent=1 // pred_region
      _
    $region173: #{tpu_custom_call.1} parent=1 // pred_fallthru
      _
    // Predicated region
    $region174: #{tpu_custom_call.1} parent=1 // pred_check
      _
    $region175: #{tpu_custom_call.1} parent=1 // pred_check_branch
      %2035 = sbr.rel (0) target = $region177
    $region176: #{tpu_custom_call.1} parent=1 // pred_region
      _
    $region177: #{tpu_custom_call.1} parent=1 // pred_fallthru
      _
    // Predicated region
    $region178: #{tpu_custom_call.1} parent=1 // pred_check
      _
    $region179: #{tpu_custom_call.1} parent=1 // pred_check_branch
      %2037 = sbr.rel (0) target = $region181
    $region180: #{tpu_custom_call.1} parent=1 // pred_region
      _
    $region181: #{tpu_custom_call.1} parent=1 // pred_fallthru
      _
    // Predicated region
    $region182: #{tpu_custom_call.1} parent=1 // pred_check
      _
    $region183: #{tpu_custom_call.1} parent=1 // pred_check_branch
      %2039 = sbr.rel (0) target = $region185
    $region184: #{tpu_custom_call.1} parent=1 // pred_region
      _
    $region185: #{tpu_custom_call.1} parent=1 // pred_fallthru
      _
    %2040 = vsyncpa [#allocation3], 1
    %2041 = vsyncpa [#allocation5], 1
    %2042 = vsyncpa [#allocation8], 1

</llo_original>
